<compile_context>
chip_gen: v7x
topology: tpu7x:2x2x1
jax: 0.10.0
libtpu: 0.0.40
codegen_flags: <defaults>
</compile_context>

<pallas_src>
import functools

import jax
import jax.numpy as jnp
from jax.experimental import pallas as pl
from jax.experimental.pallas import tpu as pltpu


PATCH = 4          # patch size of the encoder stand-in
ENC_DIM = 128      # encoder embedding dim (stand-in for TinyViT's 192), lane-dense
HIDDEN_DIM = 256   # stand-in for hidden_dim=768, multiple of 128
TILE_P = 16        # patches per reduction grid step; at this scale -> grid=(1,)


def _round_up(v, m):
    return (v + m - 1) // m * m


# ----------------------------------------------------------------------------
# Glue: patch extraction + padding to an MXU/sublane-friendly layout (layout only).
# TODO(synk): images could be stored patch-major upstream so this one-time XLA
# transpose disappears from the hot path.
# ----------------------------------------------------------------------------
def _extract_patches(x, k_pad, b_pad):
    """x: (B, C, H, W) f32 -> (n_patches * b_pad, k_pad) bf16, patch-major rows."""
    B, C, H, W = x.shape
    ph, pw = H // PATCH, W // PATCH
    p = x.reshape(B, C, ph, PATCH, pw, PATCH)
    p = p.transpose(2, 4, 0, 1, 3, 5)                    # (ph, pw, B, C, p, p)
    p = p.reshape(ph * pw, B, C * PATCH * PATCH)         # (P, B, k_raw)
    k_raw = C * PATCH * PATCH
    p = jnp.pad(p, ((0, 0), (0, b_pad - B), (0, k_pad - k_raw)))
    return p.reshape(ph * pw * b_pad, k_pad).astype(jnp.bfloat16)


# ----------------------------------------------------------------------------
# Fused Pallas kernel: patch-embed matmul + in-VMEM flatten + projection matmul
# grid = (patch_tiles,)  [reduction axis only; hidden axis collapsed]
# ----------------------------------------------------------------------------
def _fused_imagecap_kernel(tile_p, b_pad, enc_dim,
                           patches_ref, pw_ref, w2_ref, bias_ref,
                           o_ref, enc_ref):
    # patches_ref: (tile_p*b_pad, k_pad) bf16     pw_ref:   (k_pad, enc_dim) bf16
    # w2_ref:      (tile_p*enc_dim, hidden) bf16  bias_ref: (1, hidden) f32
    # o_ref:       (b_pad, hidden) f32  (VMEM-resident across the reduction axis)
    # enc_ref:     (b_pad, tile_p*enc_dim) f32 scratch ("flatten" slab)
    p_blk = pl.program_id(0)

    @pl.when(p_blk == 0)
    def _init():
        o_ref[...] = jnp.zeros_like(o_ref)

    # Encoder stand-in: ONE fat patch-embedding matmul (M = tile_p*b_pad = 128).
    enc = jnp.dot(patches_ref[...], pw_ref[...],
                  preferred_element_type=jnp.float32)        # (tile_p*b_pad, enc_dim)

    # Scatter patch-major rows into a lane-dense flatten slab:
    #   enc_ref[b, p*enc_dim + e] = enc[p*b_pad + b, e]
    # Every slice is (8, 128)-aligned -> plain vreg stores, no relayout.
    for p in range(tile_p):
        enc_ref[:, pl.ds(p * enc_dim, enc_dim)] = enc[p * b_pad:(p + 1) * b_pad, :]

    # Projection: ONE fat matmul, K = tile_p * enc_dim; single bf16 cast per step.
    o_ref[...] += jnp.dot(enc_ref[...].astype(w2_ref.dtype), w2_ref[...],
                          preferred_element_type=jnp.float32)

    @pl.when(p_blk == pl.num_programs(0) - 1)
    def _finalize():
        # patch-embed bias folded into the projection bias; added exactly once, in f32.
        o_ref[...] += bias_ref[...]


# ----------------------------------------------------------------------------
# Parameters (deterministic, scaled-down)
# ----------------------------------------------------------------------------
def init_params(key, in_channels, img_hw):
    n_side = img_hw // PATCH
    n_patches = n_side * n_side
    k_raw = in_channels * PATCH * PATCH
    k_pad = _round_up(k_raw, 128)
    k1, k2, k3, k4 = jax.random.split(key, 4)

    patch_w = 0.02 * jax.random.normal(k1, (k_raw, ENC_DIM), jnp.float32)
    patch_w = jnp.pad(patch_w, ((0, k_pad - k_raw), (0, 0)))    # zero rows for padded K
    patch_b = 0.02 * jax.random.normal(k2, (1, ENC_DIM), jnp.float32)

    # projection_layer = nn.Linear(flat_dim, hidden): W^T stored as (P*ENC_DIM, HIDDEN)
    # in flatten order f = p*ENC_DIM + e so the kernel can block it per patch tile.
    proj_w2 = (0.02 * jax.random.normal(
        k3, (n_patches * ENC_DIM, HIDDEN_DIM), jnp.float32)).astype(jnp.bfloat16)
    proj_b = 0.02 * jax.random.normal(k4, (1, HIDDEN_DIM), jnp.float32)

    # Fold the patch-embed bias into the projection bias (mathematically identical):
    #   sum_{p,e} patch_b[e] * W2[p*E+e, :] = patch_b @ sum_p W2_p
    w2_sum = proj_w2.astype(jnp.float32).reshape(n_patches, ENC_DIM, HIDDEN_DIM).sum(0)
    bias_fold = proj_b + patch_b @ w2_sum                        # (1, HIDDEN)

    return {
        "patch_w": patch_w.astype(jnp.bfloat16),   # (k_pad, ENC_DIM) bf16
        "patch_b": patch_b,                        # (1, ENC_DIM) f32 (reference only)
        "proj_w2": proj_w2,                        # (P*ENC_DIM, HIDDEN) bf16
        "proj_b": proj_b,                          # (1, HIDDEN) f32 (reference only)
        "bias_fold": bias_fold,                    # (1, HIDDEN) f32 (kernel input)
    }


# ----------------------------------------------------------------------------
# ImageCap forward
# ----------------------------------------------------------------------------
def image_cap_forward(params, x):
    """x: (B, C, H, W) float32, NCHW like PyTorch. Returns the projection (B, hidden)."""
    B = x.shape[0]
    k_pad, enc_dim = params["patch_w"].shape
    hidden = params["bias_fold"].shape[-1]
    b_pad = _round_up(max(B, 8), 8)                  # sublane-dense intermediates

    patches = _extract_patches(x, k_pad, b_pad)      # (P*b_pad, k_pad) bf16, patch-major
    n_patches = patches.shape[0] // b_pad

    tile_p = min(TILE_P, n_patches)
    assert n_patches % tile_p == 0
    grid = (n_patches // tile_p,)                    # reduction over patch tiles only

    cost = pl.CostEstimate(
        flops=(2 * n_patches * b_pad * k_pad * enc_dim          # encoder, once
               + 2 * b_pad * n_patches * enc_dim * hidden),      # projection, once
        transcendentals=0,
        bytes_accessed=(patches.size * 2 + params["patch_w"].size * 2
                        + params["proj_w2"].size * 2
                        + params["bias_fold"].size * 4 + b_pad * hidden * 4),
    )

    out = pl.pallas_call(
        functools.partial(_fused_imagecap_kernel, tile_p, b_pad, enc_dim),
        out_shape=jax.ShapeDtypeStruct((b_pad, hidden), jnp.float32),
        grid_spec=pltpu.PrefetchScalarGridSpec(
            num_scalar_prefetch=0,
            grid=grid,
            in_specs=[
                pl.BlockSpec((tile_p * b_pad, k_pad), lambda p: (p, 0)),
                pl.BlockSpec((k_pad, enc_dim), lambda p: (0, 0)),
                pl.BlockSpec((tile_p * enc_dim, hidden), lambda p: (p, 0)),
                pl.BlockSpec((1, hidden), lambda p: (0, 0)),
            ],
            out_specs=pl.BlockSpec((b_pad, hidden), lambda p: (0, 0)),
            scratch_shapes=[pltpu.VMEM((b_pad, tile_p * enc_dim), jnp.float32)],
        ),
        compiler_params=pltpu.CompilerParams(
            dimension_semantics=("arbitrary",),
        ),
        cost_estimate=cost,
    )(patches, params["patch_w"], params["proj_w2"], params["bias_fold"])

    # TODO(synk): GPT-2 decoder with beam search + forward hooks (decoder_out
    # OrderedDict) are external models/framework features; the projection (the
    # decoder's seed embedding) is returned.
    return out[:B]


# ----------------------------------------------------------------------------
# Pure-JAX reference (module semantics: encoder -> flatten -> Linear) for checks
# ----------------------------------------------------------------------------
def reference_forward(params, x):
    B, C, H, W = x.shape
    k_pad = params["patch_w"].shape[0]
    ph, pw = H // PATCH, W // PATCH
    p = x.reshape(B, C, ph, PATCH, pw, PATCH).transpose(2, 4, 0, 1, 3, 5)
    p = p.reshape(ph * pw, B, C * PATCH * PATCH)
    p = jnp.pad(p, ((0, 0), (0, 0), (0, k_pad - C * PATCH * PATCH))).astype(jnp.bfloat16)
    enc = jnp.dot(p, params["patch_w"],
                  preferred_element_type=jnp.float32) + params["patch_b"]    # (P, B, E)
    flat = jnp.swapaxes(enc, 0, 1).reshape(B, -1)          # flatten(start_dim=1)
    return jnp.dot(flat.astype(jnp.bfloat16), params["proj_w2"],
                   preferred_element_type=jnp.float32) + params["proj_b"]


if __name__ == "__main__":
    key = jax.random.PRNGKey(0)
    kx, kp = jax.random.split(key)

    B, C, HW = 2, 3, 16
    x = jax.random.normal(kx, (B, C, HW, HW), jnp.float32)   # NCHW, like PyTorch
    params = init_params(kp, C, HW)

    fwd = jax.jit(functools.partial(image_cap_forward, params))
    out = fwd(x)
    jax.block_until_ready(out)

    ref = jax.jit(functools.partial(reference_forward, params))(x)
    jax.block_until_ready(ref)

    assert out.shape == (B, HIDDEN_DIM), out.shape
    assert bool(jnp.all(jnp.isfinite(out)))
    assert jnp.allclose(out, ref, atol=2e-2, rtol=2e-2), \
        float(jnp.max(jnp.abs(out - ref)))
    print("KERNEL_OK")
</pallas_src>

<mosaic_0001>
module attributes {stable_mosaic.version = 11 : i64} {
  func.func @_fused_imagecap_kernel(%arg0: i32, %arg1: memref<128x128xbf16, #tpu.memory_space<vmem>>, %arg2: memref<128x128xbf16, #tpu.memory_space<vmem>>, %arg3: memref<2048x256xbf16, #tpu.memory_space<vmem>>, %arg4: memref<1x256xf32, #tpu.memory_space<vmem>>, %arg5: memref<8x256xf32, #tpu.memory_space<vmem>>, %arg6: memref<8x2048xf32, #tpu.memory_space<vmem>>) attributes {dimension_semantics = [#tpu.dimension_semantics<arbitrary>], iteration_bounds = array<i64: 1>, scalar_prefetch = 0 : i64, scratch_operands = 1 : i64, tpu.core_type = #tpu.core_type<tc>, window_params = [{transform_indices = @transform_0, window_bounds = array<i64: 128, 128>}, {pipeline_mode = #tpu.pipeline_mode<synchronous>, transform_indices = @transform_1, window_bounds = array<i64: 128, 128>}, {transform_indices = @transform_2, window_bounds = array<i64: 2048, 256>}, {pipeline_mode = #tpu.pipeline_mode<synchronous>, transform_indices = @transform_3, window_bounds = array<i64: 1, 256>}, {pipeline_mode = #tpu.pipeline_mode<synchronous>, transform_indices = @transform_4, window_bounds = array<i64: 8, 256>}]} {
    %c0_i32 = arith.constant 0 : i32
    %0 = arith.cmpi eq, %arg0, %c0_i32 : i32
    %1 = arith.extui %0 : i1 to i32
    %c0_i32_0 = arith.constant 0 : i32
    %2 = arith.cmpi ne, %1, %c0_i32_0 : i32
    scf.if %2 {
      %cst_32 = arith.constant 0.000000e+00 : f32
      %48 = vector.broadcast %cst_32 : f32 to vector<8x256xf32>
      %c0_33 = arith.constant 0 : index
      %c0_34 = arith.constant 0 : index
      %49 = vector.load %arg5[%c0_33, %c0_34] : memref<8x256xf32, #tpu.memory_space<vmem>>, vector<8x256xf32>
      tpu.vector_store %arg5[%c0_33, %c0_34], %48 {strides = array<i32>} : memref<8x256xf32, #tpu.memory_space<vmem>>, vector<8x256xf32>,
    } else {
    }
    %c0 = arith.constant 0 : index
    %c0_1 = arith.constant 0 : index
    %3 = vector.load %arg1[%c0, %c0_1] : memref<128x128xbf16, #tpu.memory_space<vmem>>, vector<128x128xbf16>
    %c0_2 = arith.constant 0 : index
    %c0_3 = arith.constant 0 : index
    %4 = vector.load %arg2[%c0_2, %c0_3] : memref<128x128xbf16, #tpu.memory_space<vmem>>, vector<128x128xbf16>
    %cst = arith.constant dense<0.000000e+00> : vector<128x128xf32>
    %5 = tpu.matmul %3, %4, %cst {dimension_numbers = #tpu.dot_dimension_numbers<[1], [0], [0], [1], [0, 0, 1, 1], [], []>} : vector<128x128xbf16>, vector<128x128xbf16>, vector<128x128xf32> -> vector<128x128xf32>
    %6 = vector.extract_strided_slice %5 {offsets = [0, 0], sizes = [8, 128], strides = [1, 1]} : vector<128x128xf32> to vector<8x128xf32>
    %c0_4 = arith.constant 0 : index
    %c0_5 = arith.constant 0 : index
    %7 = vector.load %arg6[%c0_4, %c0_5] : memref<8x2048xf32, #tpu.memory_space<vmem>>, vector<8x128xf32>
    tpu.vector_store %arg6[%c0_4, %c0_5], %6 {strides = array<i32>} : memref<8x2048xf32, #tpu.memory_space<vmem>>, vector<8x128xf32>,
    %8 = vector.extract_strided_slice %5 {offsets = [8, 0], sizes = [8, 128], strides = [1, 1]} : vector<128x128xf32> to vector<8x128xf32>
    %c0_6 = arith.constant 0 : index
    %c128 = arith.constant 128 : index
    %9 = vector.load %arg6[%c0_6, %c128] : memref<8x2048xf32, #tpu.memory_space<vmem>>, vector<8x128xf32>
    tpu.vector_store %arg6[%c0_6, %c128], %8 {strides = array<i32>} : memref<8x2048xf32, #tpu.memory_space<vmem>>, vector<8x128xf32>,
    %10 = vector.extract_strided_slice %5 {offsets = [16, 0], sizes = [8, 128], strides = [1, 1]} : vector<128x128xf32> to vector<8x128xf32>
    %c0_7 = arith.constant 0 : index
    %c256 = arith.constant 256 : index
    %11 = vector.load %arg6[%c0_7, %c256] : memref<8x2048xf32, #tpu.memory_space<vmem>>, vector<8x128xf32>
    tpu.vector_store %arg6[%c0_7, %c256], %10 {strides = array<i32>} : memref<8x2048xf32, #tpu.memory_space<vmem>>, vector<8x128xf32>,
    %12 = vector.extract_strided_slice %5 {offsets = [24, 0], sizes = [8, 128], strides = [1, 1]} : vector<128x128xf32> to vector<8x128xf32>
    %c0_8 = arith.constant 0 : index
    %c384 = arith.constant 384 : index
    %13 = vector.load %arg6[%c0_8, %c384] : memref<8x2048xf32, #tpu.memory_space<vmem>>, vector<8x128xf32>
    tpu.vector_store %arg6[%c0_8, %c384], %12 {strides = array<i32>} : memref<8x2048xf32, #tpu.memory_space<vmem>>, vector<8x128xf32>,
    %14 = vector.extract_strided_slice %5 {offsets = [32, 0], sizes = [8, 128], strides = [1, 1]} : vector<128x128xf32> to vector<8x128xf32>
    %c0_9 = arith.constant 0 : index
    %c512 = arith.constant 512 : index
    %15 = vector.load %arg6[%c0_9, %c512] : memref<8x2048xf32, #tpu.memory_space<vmem>>, vector<8x128xf32>
    tpu.vector_store %arg6[%c0_9, %c512], %14 {strides = array<i32>} : memref<8x2048xf32, #tpu.memory_space<vmem>>, vector<8x128xf32>,
    %16 = vector.extract_strided_slice %5 {offsets = [40, 0], sizes = [8, 128], strides = [1, 1]} : vector<128x128xf32> to vector<8x128xf32>
    %c0_10 = arith.constant 0 : index
    %c640 = arith.constant 640 : index
    %17 = vector.load %arg6[%c0_10, %c640] : memref<8x2048xf32, #tpu.memory_space<vmem>>, vector<8x128xf32>
    tpu.vector_store %arg6[%c0_10, %c640], %16 {strides = array<i32>} : memref<8x2048xf32, #tpu.memory_space<vmem>>, vector<8x128xf32>,
    %18 = vector.extract_strided_slice %5 {offsets = [48, 0], sizes = [8, 128], strides = [1, 1]} : vector<128x128xf32> to vector<8x128xf32>
    %c0_11 = arith.constant 0 : index
    %c768 = arith.constant 768 : index
    %19 = vector.load %arg6[%c0_11, %c768] : memref<8x2048xf32, #tpu.memory_space<vmem>>, vector<8x128xf32>
    tpu.vector_store %arg6[%c0_11, %c768], %18 {strides = array<i32>} : memref<8x2048xf32, #tpu.memory_space<vmem>>, vector<8x128xf32>,
    %20 = vector.extract_strided_slice %5 {offsets = [56, 0], sizes = [8, 128], strides = [1, 1]} : vector<128x128xf32> to vector<8x128xf32>
    %c0_12 = arith.constant 0 : index
    %c896 = arith.constant 896 : index
    %21 = vector.load %arg6[%c0_12, %c896] : memref<8x2048xf32, #tpu.memory_space<vmem>>, vector<8x128xf32>
    tpu.vector_store %arg6[%c0_12, %c896], %20 {strides = array<i32>} : memref<8x2048xf32, #tpu.memory_space<vmem>>, vector<8x128xf32>,
    %22 = vector.extract_strided_slice %5 {offsets = [64, 0], sizes = [8, 128], strides = [1, 1]} : vector<128x128xf32> to vector<8x128xf32>
    %c0_13 = arith.constant 0 : index
    %c1024 = arith.constant 1024 : index
    %23 = vector.load %arg6[%c0_13, %c1024] : memref<8x2048xf32, #tpu.memory_space<vmem>>, vector<8x128xf32>
    tpu.vector_store %arg6[%c0_13, %c1024], %22 {strides = array<i32>} : memref<8x2048xf32, #tpu.memory_space<vmem>>, vector<8x128xf32>,
    %24 = vector.extract_strided_slice %5 {offsets = [72, 0], sizes = [8, 128], strides = [1, 1]} : vector<128x128xf32> to vector<8x128xf32>
    %c0_14 = arith.constant 0 : index
    %c1152 = arith.constant 1152 : index
    %25 = vector.load %arg6[%c0_14, %c1152] : memref<8x2048xf32, #tpu.memory_space<vmem>>, vector<8x128xf32>
    tpu.vector_store %arg6[%c0_14, %c1152], %24 {strides = array<i32>} : memref<8x2048xf32, #tpu.memory_space<vmem>>, vector<8x128xf32>,
    %26 = vector.extract_strided_slice %5 {offsets = [80, 0], sizes = [8, 128], strides = [1, 1]} : vector<128x128xf32> to vector<8x128xf32>
    %c0_15 = arith.constant 0 : index
    %c1280 = arith.constant 1280 : index
    %27 = vector.load %arg6[%c0_15, %c1280] : memref<8x2048xf32, #tpu.memory_space<vmem>>, vector<8x128xf32>
    tpu.vector_store %arg6[%c0_15, %c1280], %26 {strides = array<i32>} : memref<8x2048xf32, #tpu.memory_space<vmem>>, vector<8x128xf32>,
    %28 = vector.extract_strided_slice %5 {offsets = [88, 0], sizes = [8, 128], strides = [1, 1]} : vector<128x128xf32> to vector<8x128xf32>
    %c0_16 = arith.constant 0 : index
    %c1408 = arith.constant 1408 : index
    %29 = vector.load %arg6[%c0_16, %c1408] : memref<8x2048xf32, #tpu.memory_space<vmem>>, vector<8x128xf32>
    tpu.vector_store %arg6[%c0_16, %c1408], %28 {strides = array<i32>} : memref<8x2048xf32, #tpu.memory_space<vmem>>, vector<8x128xf32>,
    %30 = vector.extract_strided_slice %5 {offsets = [96, 0], sizes = [8, 128], strides = [1, 1]} : vector<128x128xf32> to vector<8x128xf32>
    %c0_17 = arith.constant 0 : index
    %c1536 = arith.constant 1536 : index
    %31 = vector.load %arg6[%c0_17, %c1536] : memref<8x2048xf32, #tpu.memory_space<vmem>>, vector<8x128xf32>
    tpu.vector_store %arg6[%c0_17, %c1536], %30 {strides = array<i32>} : memref<8x2048xf32, #tpu.memory_space<vmem>>, vector<8x128xf32>,
    %32 = vector.extract_strided_slice %5 {offsets = [104, 0], sizes = [8, 128], strides = [1, 1]} : vector<128x128xf32> to vector<8x128xf32>
    %c0_18 = arith.constant 0 : index
    %c1664 = arith.constant 1664 : index
    %33 = vector.load %arg6[%c0_18, %c1664] : memref<8x2048xf32, #tpu.memory_space<vmem>>, vector<8x128xf32>
    tpu.vector_store %arg6[%c0_18, %c1664], %32 {strides = array<i32>} : memref<8x2048xf32, #tpu.memory_space<vmem>>, vector<8x128xf32>,
    %34 = vector.extract_strided_slice %5 {offsets = [112, 0], sizes = [8, 128], strides = [1, 1]} : vector<128x128xf32> to vector<8x128xf32>
    %c0_19 = arith.constant 0 : index
    %c1792 = arith.constant 1792 : index
    %35 = vector.load %arg6[%c0_19, %c1792] : memref<8x2048xf32, #tpu.memory_space<vmem>>, vector<8x128xf32>
    tpu.vector_store %arg6[%c0_19, %c1792], %34 {strides = array<i32>} : memref<8x2048xf32, #tpu.memory_space<vmem>>, vector<8x128xf32>,
    %36 = vector.extract_strided_slice %5 {offsets = [120, 0], sizes = [8, 128], strides = [1, 1]} : vector<128x128xf32> to vector<8x128xf32>
    %c0_20 = arith.constant 0 : index
    %c1920 = arith.constant 1920 : index
    %37 = vector.load %arg6[%c0_20, %c1920] : memref<8x2048xf32, #tpu.memory_space<vmem>>, vector<8x128xf32>
    tpu.vector_store %arg6[%c0_20, %c1920], %36 {strides = array<i32>} : memref<8x2048xf32, #tpu.memory_space<vmem>>, vector<8x128xf32>,
    %c0_21 = arith.constant 0 : index
    %c0_22 = arith.constant 0 : index
    %38 = vector.load %arg5[%c0_21, %c0_22] : memref<8x256xf32, #tpu.memory_space<vmem>>, vector<8x256xf32>
    %c0_23 = arith.constant 0 : index
    %c0_24 = arith.constant 0 : index
    %39 = vector.load %arg6[%c0_23, %c0_24] : memref<8x2048xf32, #tpu.memory_space<vmem>>, vector<8x2048xf32>
    %40 = arith.truncf %39 : vector<8x2048xf32> to vector<8x2048xbf16>
    %c0_25 = arith.constant 0 : index
    %c0_26 = arith.constant 0 : index
    %41 = vector.load %arg3[%c0_25, %c0_26] : memref<2048x256xbf16, #tpu.memory_space<vmem>>, vector<2048x256xbf16>
    %cst_27 = arith.constant dense<0.000000e+00> : vector<8x256xf32>
    %42 = tpu.matmul %40, %41, %cst_27 {dimension_numbers = #tpu.dot_dimension_numbers<[1], [0], [0], [1], [0, 0, 1, 1], [], []>} : vector<8x2048xbf16>, vector<2048x256xbf16>, vector<8x256xf32> -> vector<8x256xf32>
    %43 = arith.addf %38, %42 : vector<8x256xf32>
    %c0_28 = arith.constant 0 : index
    %c0_29 = arith.constant 0 : index
    %44 = vector.load %arg5[%c0_28, %c0_29] : memref<8x256xf32, #tpu.memory_space<vmem>>, vector<8x256xf32>
    tpu.vector_store %arg5[%c0_28, %c0_29], %43 {strides = array<i32>} : memref<8x256xf32, #tpu.memory_space<vmem>>, vector<8x256xf32>,
    %c0_i32_30 = arith.constant 0 : i32
    %45 = arith.cmpi eq, %arg0, %c0_i32_30 : i32
    %46 = arith.extui %45 : i1 to i32
    %c0_i32_31 = arith.constant 0 : i32
    %47 = arith.cmpi ne, %46, %c0_i32_31 : i32
    scf.if %47 {
      %c0_32 = arith.constant 0 : index
      %c0_33 = arith.constant 0 : index
      %48 = vector.load %arg5[%c0_32, %c0_33] : memref<8x256xf32, #tpu.memory_space<vmem>>, vector<8x256xf32>
      %c0_34 = arith.constant 0 : index
      %c0_35 = arith.constant 0 : index
      %49 = vector.load %arg4[%c0_34, %c0_35] : memref<1x256xf32, #tpu.memory_space<vmem>>, vector<1x256xf32>
      %50 = vector.broadcast %49 : vector<1x256xf32> to vector<8x256xf32>
      %51 = arith.addf %48, %50 : vector<8x256xf32>
      %c0_36 = arith.constant 0 : index
      %c0_37 = arith.constant 0 : index
      %52 = vector.load %arg5[%c0_36, %c0_37] : memref<8x256xf32, #tpu.memory_space<vmem>>, vector<8x256xf32>
      tpu.vector_store %arg5[%c0_36, %c0_37], %51 {strides = array<i32>} : memref<8x256xf32, #tpu.memory_space<vmem>>, vector<8x256xf32>,
    } else {
    }
    return
  }
  func.func @transform_0(%arg0: i32) -> (i32, i32) {
    %c0_i32 = arith.constant 0 : i32
    %c0_i32_0 = arith.constant 0 : i32
    return %arg0, %c0_i32 : i32, i32
  }
  func.func @transform_1(%arg0: i32) -> (i32, i32) {
    %c0_i32 = arith.constant 0 : i32
    %c0_i32_0 = arith.constant 0 : i32
    %c0_i32_1 = arith.constant 0 : i32
    return %c0_i32, %c0_i32_0 : i32, i32
  }
  func.func @transform_2(%arg0: i32) -> (i32, i32) {
    %c0_i32 = arith.constant 0 : i32
    %c0_i32_0 = arith.constant 0 : i32
    return %arg0, %c0_i32 : i32, i32
  }
  func.func @transform_3(%arg0: i32) -> (i32, i32) {
    %c0_i32 = arith.constant 0 : i32
    %c0_i32_0 = arith.constant 0 : i32
    %c0_i32_1 = arith.constant 0 : i32
    return %c0_i32, %c0_i32_0 : i32, i32
  }
  func.func @transform_4(%arg0: i32) -> (i32, i32) {
    %c0_i32 = arith.constant 0 : i32
    %c0_i32_0 = arith.constant 0 : i32
    %c0_i32_1 = arith.constant 0 : i32
    return %c0_i32, %c0_i32_0 : i32, i32
  }
}

</mosaic_0001>

<llo_original>
// kernel: image_cap_forward.1
$region0: #{image_cap_forward.1}
  #allocation0 [shape = 'u32[]', space=smem, size = 0x4, offset = 0x4, fixed_abs, tag = 'smem constant byte address 0x4 - core index']
  #allocation1 [shape = 'u32[144,128]{1,0:T(1,128)}', space=vmem, size = 0x12000, scoped, tag = 'internal scratch']
  #allocation2 [shape = 'f32[8,2048]{1,0:T(8,128)}', space=vmem, size = 0x10000, scoped, tag = 'scratch operand']
  %s0 = inlined_call_operand.vmem [shape: bf16[128,128], index: 0, kind: input, shape index: {}]
  %s1 = inlined_call_operand.vmem [shape: bf16[128,128], index: 1, kind: input, shape index: {}]
  %s2 = inlined_call_operand.vmem [shape: bf16[2048,256], index: 2, kind: input, shape index: {}]
  %s3 = inlined_call_operand.vmem [shape: f32[1,256], index: 3, kind: input, shape index: {}]
  %s4 = inlined_call_operand.vmem [shape: f32[8,256], index: 4, kind: output, shape index: {}]
  %s5 = sld [smem:[#allocation0]]
  $region34: #{image_cap_forward.1} parent=0
    _
  %s7 = ssub.s32 1, %s5
  %s8 = scalar_select 0, %s7, %s5
  // Predicated region
  $region2: #{image_cap_forward.1} parent=0 // pred_check
    _
  $region3: #{image_cap_forward.1} parent=0 // pred_check_branch
    %10 = sbr.rel (0) target = $region5
  $region4: #{image_cap_forward.1} parent=0 // pred_region
    _
  $region5: #{image_cap_forward.1} parent=0 // pred_fallthru
    _
  // Predicated region
  $region6: #{image_cap_forward.1} parent=0 // pred_check
    _
  $region7: #{image_cap_forward.1} parent=0 // pred_check_branch
    %12 = sbr.rel (0) target = $region9
  $region8: #{image_cap_forward.1} parent=0 // pred_region
    _
  $region9: #{image_cap_forward.1} parent=0 // pred_fallthru
    _
  // Predicated region
  $region10: #{image_cap_forward.1} parent=0 // pred_check
    _
  $region11: #{image_cap_forward.1} parent=0 // pred_check_branch
    %14 = sbr.rel (0) target = $region13
  $region12: #{image_cap_forward.1} parent=0 // pred_region
    _
  $region13: #{image_cap_forward.1} parent=0 // pred_fallthru
    _
  // Predicated region
  $region14: #{image_cap_forward.1} parent=0 // pred_check
    _
  $region15: #{image_cap_forward.1} parent=0 // pred_check_branch
    %16 = sbr.rel (0) target = $region17
  $region16: #{image_cap_forward.1} parent=0 // pred_region
    _
  $region17: #{image_cap_forward.1} parent=0 // pred_fallthru
    _
  %p18 = scmp.eq.s32.totalorder 0, 0
  // Predicated region
  $region18: #{image_cap_forward.1} parent=0 // pred_check
    %p19 = pneg %p18
  $region19: #{image_cap_forward.1} parent=0 // pred_check_branch
    %21 = sbr.rel (%p19) target = $region21
  $region20: #{image_cap_forward.1} parent=0 // pred_region
    %22 = vst [vmem:[%s4] sm:$0xff] 0.0
    %23 = vst [vmem:[%s4 + $0x8] sm:$0xff] 0.0
  $region21: #{image_cap_forward.1} parent=0 // pred_fallthru
    _
  %v24 = vld [vmem:[%s0] sm:$0xf]
  %v25 = vld [vmem:[%s0 + $0x4] sm:$0xf]
  %v26 = vld [vmem:[%s0 + $0x8] sm:$0xf]
  %v27 = vld [vmem:[%s0 + $0xc] sm:$0xf]
  %v28 = vld [vmem:[%s0 + $0x10] sm:$0xf]
  %v29 = vld [vmem:[%s0 + $0x14] sm:$0xf]
  %v30 = vld [vmem:[%s0 + $0x18] sm:$0xf]
  %v31 = vld [vmem:[%s0 + $0x1c] sm:$0xf]
  %v32 = vld [vmem:[%s0 + $0x20] sm:$0xf]
  %v33 = vld [vmem:[%s0 + $0x24] sm:$0xf]
  %v34 = vld [vmem:[%s0 + $0x28] sm:$0xf]
  %v35 = vld [vmem:[%s0 + $0x2c] sm:$0xf]
  %v36 = vld [vmem:[%s0 + $0x30] sm:$0xf]
  %v37 = vld [vmem:[%s0 + $0x34] sm:$0xf]
  %v38 = vld [vmem:[%s0 + $0x38] sm:$0xf]
  %v39 = vld [vmem:[%s0 + $0x3c] sm:$0xf]
  %v40 = vld [vmem:[%s1] sm:$0xf]
  %v41 = vld [vmem:[%s1 + $0x4] sm:$0xf]
  %v42 = vld [vmem:[%s1 + $0x8] sm:$0xf]
  %v43 = vld [vmem:[%s1 + $0xc] sm:$0xf]
  %v44 = vld [vmem:[%s1 + $0x10] sm:$0xf]
  %v45 = vld [vmem:[%s1 + $0x14] sm:$0xf]
  %v46 = vld [vmem:[%s1 + $0x18] sm:$0xf]
  %v47 = vld [vmem:[%s1 + $0x1c] sm:$0xf]
  %v48 = vld [vmem:[%s1 + $0x20] sm:$0xf]
  %v49 = vld [vmem:[%s1 + $0x24] sm:$0xf]
  %v50 = vld [vmem:[%s1 + $0x28] sm:$0xf]
  %v51 = vld [vmem:[%s1 + $0x2c] sm:$0xf]
  %v52 = vld [vmem:[%s1 + $0x30] sm:$0xf]
  %v53 = vld [vmem:[%s1 + $0x34] sm:$0xf]
  %v54 = vld [vmem:[%s1 + $0x38] sm:$0xf]
  %v55 = vld [vmem:[%s1 + $0x3c] sm:$0xf]
  %v72 = vunpack.c.l.b16 %v24
  %v73 = vunpack.c.l.b16 %v25
  %v74 = vunpack.c.l.b16 %v26
  %v75 = vunpack.c.l.b16 %v27
  %v76 = vunpack.c.l.b16 %v28
  %v77 = vunpack.c.l.b16 %v29
  %v78 = vunpack.c.l.b16 %v30
  %v79 = vunpack.c.l.b16 %v31
  %v80 = vunpack.c.l.b16 %v32
  %v81 = vunpack.c.l.b16 %v33
  %v82 = vunpack.c.l.b16 %v34
  %v83 = vunpack.c.l.b16 %v35
  %v84 = vunpack.c.l.b16 %v36
  %v85 = vunpack.c.l.b16 %v37
  %v86 = vunpack.c.l.b16 %v38
  %v87 = vunpack.c.l.b16 %v39
  %v88 = vpack.c.b16 %v73, %v72
  %v89 = vpack.c.b16 %v75, %v74
  %v90 = vpack.c.b16 %v77, %v76
  %v91 = vpack.c.b16 %v79, %v78
  %v92 = vpack.c.b16 %v81, %v80
  %v93 = vpack.c.b16 %v83, %v82
  %v94 = vpack.c.b16 %v85, %v84
  %v95 = vpack.c.b16 %v87, %v86
  %v120 = vunpack.c.l.b16 %v40
  %v121 = vunpack.c.l.b16 %v41
  %v122 = vunpack.c.l.b16 %v42
  %v123 = vunpack.c.l.b16 %v43
  %v124 = vunpack.c.l.b16 %v44
  %v125 = vunpack.c.l.b16 %v45
  %v126 = vunpack.c.l.b16 %v46
  %v127 = vunpack.c.l.b16 %v47
  %v128 = vunpack.c.l.b16 %v48
  %v129 = vunpack.c.l.b16 %v49
  %v130 = vunpack.c.l.b16 %v50
  %v131 = vunpack.c.l.b16 %v51
  %v132 = vunpack.c.l.b16 %v52
  %v133 = vunpack.c.l.b16 %v53
  %v134 = vunpack.c.l.b16 %v54
  %v135 = vunpack.c.l.b16 %v55
  %v136 = vpack.c.b16 %v121, %v120
  %v137 = vpack.c.b16 %v123, %v122
  %v138 = vpack.c.b16 %v125, %v124
  %v139 = vpack.c.b16 %v127, %v126
  %v140 = vpack.c.b16 %v129, %v128
  %v141 = vpack.c.b16 %v131, %v130
  %v142 = vpack.c.b16 %v133, %v132
  %v143 = vpack.c.b16 %v135, %v134
  %152 = vmatprep.subr.bf16.mxu0 0
  %153 = vmatpush1.bf16.msra.mxu0 %v136
  %154 = vmatprep.subr.bf16.mxu0 0
  %155 = vmatpush1.bf16.msra.mxu0 %v137
  %156 = vmatprep.subr.bf16.mxu0 0
  %157 = vmatpush1.bf16.msra.mxu0 %v138
  %158 = vmatprep.subr.bf16.mxu0 0
  %159 = vmatpush1.bf16.msra.mxu0 %v139
  %160 = vmatprep.subr.bf16.mxu0 0
  %161 = vmatpush1.bf16.msra.mxu0 %v140
  %162 = vmatprep.subr.bf16.mxu0 0
  %163 = vmatpush1.bf16.msra.mxu0 %v141
  %164 = vmatprep.subr.bf16.mxu0 0
  %165 = vmatpush1.bf16.msra.mxu0 %v142
  %166 = vmatprep.subr.bf16.mxu0 0
  %167 = vmatpush1.bf16.msra.mxu0 %v143
  %168 = vmatprep.subr.bf16.mxu0 0
  %169 = vmatpush1.bf16.msra.mxu0 0
  %170 = vmatprep.subr.bf16.mxu0 0
  %171 = vmatpush1.bf16.msra.mxu0 0
  %172 = vmatprep.subr.bf16.mxu0 0
  %173 = vmatpush1.bf16.msra.mxu0 0
  %174 = vmatprep.subr.bf16.mxu0 0
  %175 = vmatpush1.bf16.msra.mxu0 0
  %176 = vmatprep.subr.bf16.mxu0 0
  %177 = vmatpush1.bf16.msra.mxu0 0
  %178 = vmatprep.subr.bf16.mxu0 0
  %179 = vmatpush1.bf16.msra.mxu0 0
  %180 = vmatprep.subr.bf16.mxu0 0
  %181 = vmatpush1.bf16.msra.mxu0 0
  %182 = vmatprep.subr.bf16.mxu0 0
  %183 = vmatpush1.bf16.msra.mxu0 0
  %184 = vmatprep.mubr.bf16.mxu0 0
  %185 = vmatmul.mubr.bf16.gmra.mrb[0].mxu0 %v88
  %v186 = vpop.f32.mrb[0].mxu0
  %v187 = vadd.f32 0.0, %v186
  %v188 = vpop.f32.mrb[0].mxu0
  %v189 = vpop.f32.mrb[0].mxu0
  %v190 = vadd.f32 0.0, %v189
  %v191 = vpop.f32.mrb[0].mxu0
  %192 = vmatprep.mubr.bf16.mxu0 0
  %193 = vmatmul.mubr.bf16.gmra.mrb[0].mxu0 %v89
  %v194 = vpop.f32.mrb[0].mxu0
  %v195 = vadd.f32 0.0, %v194
  %v196 = vpop.f32.mrb[0].mxu0
  %v197 = vpop.f32.mrb[0].mxu0
  %v198 = vadd.f32 0.0, %v197
  %v199 = vpop.f32.mrb[0].mxu0
  %200 = vmatprep.mubr.bf16.mxu0 0
  %201 = vmatmul.mubr.bf16.gmra.mrb[0].mxu0 %v90
  %v202 = vpop.f32.mrb[0].mxu0
  %v203 = vadd.f32 0.0, %v202
  %v204 = vpop.f32.mrb[0].mxu0
  %v205 = vpop.f32.mrb[0].mxu0
  %v206 = vadd.f32 0.0, %v205
  %v207 = vpop.f32.mrb[0].mxu0
  %208 = vmatprep.mubr.bf16.mxu0 0
  %209 = vmatmul.mubr.bf16.gmra.mrb[0].mxu0 %v91
  %v210 = vpop.f32.mrb[0].mxu0
  %v211 = vadd.f32 0.0, %v210
  %v212 = vpop.f32.mrb[0].mxu0
  %v213 = vpop.f32.mrb[0].mxu0
  %v214 = vadd.f32 0.0, %v213
  %v215 = vpop.f32.mrb[0].mxu0
  %216 = vmatprep.mubr.bf16.mxu0 0
  %217 = vmatmul.mubr.bf16.gmra.mrb[0].mxu0 %v92
  %v218 = vpop.f32.mrb[0].mxu0
  %v219 = vadd.f32 0.0, %v218
  %v220 = vpop.f32.mrb[0].mxu0
  %v221 = vpop.f32.mrb[0].mxu0
  %v222 = vadd.f32 0.0, %v221
  %v223 = vpop.f32.mrb[0].mxu0
  %224 = vmatprep.mubr.bf16.mxu0 0
  %225 = vmatmul.mubr.bf16.gmra.mrb[0].mxu0 %v93
  %v226 = vpop.f32.mrb[0].mxu0
  %v227 = vadd.f32 0.0, %v226
  %v228 = vpop.f32.mrb[0].mxu0
  %v229 = vpop.f32.mrb[0].mxu0
  %v230 = vadd.f32 0.0, %v229
  %v231 = vpop.f32.mrb[0].mxu0
  %232 = vmatprep.mubr.bf16.mxu0 0
  %233 = vmatmul.mubr.bf16.gmra.mrb[0].mxu0 %v94
  %v234 = vpop.f32.mrb[0].mxu0
  %v235 = vadd.f32 0.0, %v234
  %v236 = vpop.f32.mrb[0].mxu0
  %v237 = vpop.f32.mrb[0].mxu0
  %v238 = vadd.f32 0.0, %v237
  %v239 = vpop.f32.mrb[0].mxu0
  %240 = vmatprep.mubr.bf16.mxu0 0
  %241 = vmatmul.mubr.bf16.gmra.mrb[0].mxu0 %v95
  %v242 = vpop.f32.mrb[0].mxu0
  %v243 = vadd.f32 0.0, %v242
  %v244 = vpop.f32.mrb[0].mxu0
  %v245 = vpop.f32.mrb[0].mxu0
  %v246 = vadd.f32 0.0, %v245
  %v247 = vpop.f32.mrb[0].mxu0
  %248 = vdwg.mxu0
  %249 = vst [vmem:[#allocation2] sm:$0xff] %v187
  %250 = vst [vmem:[#allocation2 + $0x8] sm:$0xff] %v190
  %251 = vst [vmem:[#allocation2 + $0x10] sm:$0xff] %v195
  %252 = vst [vmem:[#allocation2 + $0x18] sm:$0xff] %v198
  %253 = vst [vmem:[#allocation2 + $0x20] sm:$0xff] %v203
  %254 = vst [vmem:[#allocation2 + $0x28] sm:$0xff] %v206
  %255 = vst [vmem:[#allocation2 + $0x30] sm:$0xff] %v211
  %256 = vst [vmem:[#allocation2 + $0x38] sm:$0xff] %v214
  %257 = vst [vmem:[#allocation2 + $0x40] sm:$0xff] %v219
  %258 = vst [vmem:[#allocation2 + $0x48] sm:$0xff] %v222
  %259 = vst [vmem:[#allocation2 + $0x50] sm:$0xff] %v227
  %260 = vst [vmem:[#allocation2 + $0x58] sm:$0xff] %v230
  %261 = vst [vmem:[#allocation2 + $0x60] sm:$0xff] %v235
  %262 = vst [vmem:[#allocation2 + $0x68] sm:$0xff] %v238
  %263 = vst [vmem:[#allocation2 + $0x70] sm:$0xff] %v243
  %264 = vst [vmem:[#allocation2 + $0x78] sm:$0xff] %v246
  %v265 = vld [vmem:[%s4] sm:$0xff]
  %v266 = vld [vmem:[%s4 + $0x8] sm:$0xff]
  %v267 = vld [vmem:[#allocation2] sm:$0xff]
  %v268 = vld [vmem:[#allocation2 + $0x8] sm:$0xff]
  %v269 = vld [vmem:[#allocation2 + $0x10] sm:$0xff]
  %v270 = vld [vmem:[#allocation2 + $0x18] sm:$0xff]
  %v271 = vld [vmem:[#allocation2 + $0x20] sm:$0xff]
  %v272 = vld [vmem:[#allocation2 + $0x28] sm:$0xff]
  %v273 = vld [vmem:[#allocation2 + $0x30] sm:$0xff]
  %v274 = vld [vmem:[#allocation2 + $0x38] sm:$0xff]
  %v275 = vld [vmem:[#allocation2 + $0x40] sm:$0xff]
  %v276 = vld [vmem:[#allocation2 + $0x48] sm:$0xff]
  %v277 = vld [vmem:[#allocation2 + $0x50] sm:$0xff]
  %v278 = vld [vmem:[#allocation2 + $0x58] sm:$0xff]
  %v279 = vld [vmem:[#allocation2 + $0x60] sm:$0xff]
  %v280 = vld [vmem:[#allocation2 + $0x68] sm:$0xff]
  %v281 = vld [vmem:[#allocation2 + $0x70] sm:$0xff]
  %v282 = vld [vmem:[#allocation2 + $0x78] sm:$0xff]
  %v283 = vpack.c.bf16 %v267, %v267
  %v284 = vpack.c.bf16 %v268, %v268
  %v285 = vpack.c.bf16 %v269, %v269
  %v286 = vpack.c.bf16 %v270, %v270
  %v287 = vpack.c.bf16 %v271, %v271
  %v288 = vpack.c.bf16 %v272, %v272
  %v289 = vpack.c.bf16 %v273, %v273
  %v290 = vpack.c.bf16 %v274, %v274
  %v291 = vpack.c.bf16 %v275, %v275
  %v292 = vpack.c.bf16 %v276, %v276
  %v293 = vpack.c.bf16 %v277, %v277
  %v294 = vpack.c.bf16 %v278, %v278
  %v295 = vpack.c.bf16 %v279, %v279
  %v296 = vpack.c.bf16 %v280, %v280
  %v297 = vpack.c.bf16 %v281, %v281
  %v298 = vpack.c.bf16 %v282, %v282
  %v299 = vld [vmem:[%s2] sm:$0xff]
  %v300 = vld [vmem:[%s2 + $0x8] sm:$0xff]
  %v301 = vld [vmem:[%s2 + $0x10] sm:$0xff]
  %v302 = vld [vmem:[%s2 + $0x18] sm:$0xff]
  %v303 = vld [vmem:[%s2 + $0x20] sm:$0xff]
  %v304 = vld [vmem:[%s2 + $0x28] sm:$0xff]
  %v305 = vld [vmem:[%s2 + $0x30] sm:$0xff]
  %v306 = vld [vmem:[%s2 + $0x38] sm:$0xff]
  %v307 = vld [vmem:[%s2 + $0x40] sm:$0xff]
  %v308 = vld [vmem:[%s2 + $0x48] sm:$0xff]
  %v309 = vld [vmem:[%s2 + $0x50] sm:$0xff]
  %v310 = vld [vmem:[%s2 + $0x58] sm:$0xff]
  %v311 = vld [vmem:[%s2 + $0x60] sm:$0xff]
  %v312 = vld [vmem:[%s2 + $0x68] sm:$0xff]
  %v313 = vld [vmem:[%s2 + $0x70] sm:$0xff]
  %v314 = vld [vmem:[%s2 + $0x78] sm:$0xff]
  %v315 = vld [vmem:[%s2 + $0x80] sm:$0xff]
  %v316 = vld [vmem:[%s2 + $0x88] sm:$0xff]
  %v317 = vld [vmem:[%s2 + $0x90] sm:$0xff]
  %v318 = vld [vmem:[%s2 + $0x98] sm:$0xff]
  %v319 = vld [vmem:[%s2 + $0xa0] sm:$0xff]
  %v320 = vld [vmem:[%s2 + $0xa8] sm:$0xff]
  %v321 = vld [vmem:[%s2 + $0xb0] sm:$0xff]
  %v322 = vld [vmem:[%s2 + $0xb8] sm:$0xff]
  %v323 = vld [vmem:[%s2 + $0xc0] sm:$0xff]
  %v324 = vld [vmem:[%s2 + $0xc8] sm:$0xff]
  %v325 = vld [vmem:[%s2 + $0xd0] sm:$0xff]
  %v326 = vld [vmem:[%s2 + $0xd8] sm:$0xff]
  %v327 = vld [vmem:[%s2 + $0xe0] sm:$0xff]
  %v328 = vld [vmem:[%s2 + $0xe8] sm:$0xff]
  %v329 = vld [vmem:[%s2 + $0xf0] sm:$0xff]
  %v330 = vld [vmem:[%s2 + $0xf8] sm:$0xff]
  %v331 = vld [vmem:[%s2 + $0x100] sm:$0xff]
  %v332 = vld [vmem:[%s2 + $0x108] sm:$0xff]
  %v333 = vld [vmem:[%s2 + $0x110] sm:$0xff]
  %v334 = vld [vmem:[%s2 + $0x118] sm:$0xff]
  %v335 = vld [vmem:[%s2 + $0x120] sm:$0xff]
  %v336 = vld [vmem:[%s2 + $0x128] sm:$0xff]
  %v337 = vld [vmem:[%s2 + $0x130] sm:$0xff]
  %v338 = vld [vmem:[%s2 + $0x138] sm:$0xff]
  %v339 = vld [vmem:[%s2 + $0x140] sm:$0xff]
  %v340 = vld [vmem:[%s2 + $0x148] sm:$0xff]
  %v341 = vld [vmem:[%s2 + $0x150] sm:$0xff]
  %v342 = vld [vmem:[%s2 + $0x158] sm:$0xff]
  %v343 = vld [vmem:[%s2 + $0x160] sm:$0xff]
  %v344 = vld [vmem:[%s2 + $0x168] sm:$0xff]
  %v345 = vld [vmem:[%s2 + $0x170] sm:$0xff]
  %v346 = vld [vmem:[%s2 + $0x178] sm:$0xff]
  %v347 = vld [vmem:[%s2 + $0x180] sm:$0xff]
  %v348 = vld [vmem:[%s2 + $0x188] sm:$0xff]
  %v349 = vld [vmem:[%s2 + $0x190] sm:$0xff]
  %v350 = vld [vmem:[%s2 + $0x198] sm:$0xff]
  %v351 = vld [vmem:[%s2 + $0x1a0] sm:$0xff]
  %v352 = vld [vmem:[%s2 + $0x1a8] sm:$0xff]
  %v353 = vld [vmem:[%s2 + $0x1b0] sm:$0xff]
  %v354 = vld [vmem:[%s2 + $0x1b8] sm:$0xff]
  %v355 = vld [vmem:[%s2 + $0x1c0] sm:$0xff]
  %v356 = vld [vmem:[%s2 + $0x1c8] sm:$0xff]
  %v357 = vld [vmem:[%s2 + $0x1d0] sm:$0xff]
  %v358 = vld [vmem:[%s2 + $0x1d8] sm:$0xff]
  %v359 = vld [vmem:[%s2 + $0x1e0] sm:$0xff]
  %v360 = vld [vmem:[%s2 + $0x1e8] sm:$0xff]
  %v361 = vld [vmem:[%s2 + $0x1f0] sm:$0xff]
  %v362 = vld [vmem:[%s2 + $0x1f8] sm:$0xff]
  %v363 = vld [vmem:[%s2 + $0x200] sm:$0xff]
  %v364 = vld [vmem:[%s2 + $0x208] sm:$0xff]
  %v365 = vld [vmem:[%s2 + $0x210] sm:$0xff]
  %v366 = vld [vmem:[%s2 + $0x218] sm:$0xff]
  %v367 = vld [vmem:[%s2 + $0x220] sm:$0xff]
  %v368 = vld [vmem:[%s2 + $0x228] sm:$0xff]
  %v369 = vld [vmem:[%s2 + $0x230] sm:$0xff]
  %v370 = vld [vmem:[%s2 + $0x238] sm:$0xff]
  %v371 = vld [vmem:[%s2 + $0x240] sm:$0xff]
  %v372 = vld [vmem:[%s2 + $0x248] sm:$0xff]
  %v373 = vld [vmem:[%s2 + $0x250] sm:$0xff]
  %v374 = vld [vmem:[%s2 + $0x258] sm:$0xff]
  %v375 = vld [vmem:[%s2 + $0x260] sm:$0xff]
  %v376 = vld [vmem:[%s2 + $0x268] sm:$0xff]
  %v377 = vld [vmem:[%s2 + $0x270] sm:$0xff]
  %v378 = vld [vmem:[%s2 + $0x278] sm:$0xff]
  %v379 = vld [vmem:[%s2 + $0x280] sm:$0xff]
  %v380 = vld [vmem:[%s2 + $0x288] sm:$0xff]
  %v381 = vld [vmem:[%s2 + $0x290] sm:$0xff]
  %v382 = vld [vmem:[%s2 + $0x298] sm:$0xff]
  %v383 = vld [vmem:[%s2 + $0x2a0] sm:$0xff]
  %v384 = vld [vmem:[%s2 + $0x2a8] sm:$0xff]
  %v385 = vld [vmem:[%s2 + $0x2b0] sm:$0xff]
  %v386 = vld [vmem:[%s2 + $0x2b8] sm:$0xff]
  %v387 = vld [vmem:[%s2 + $0x2c0] sm:$0xff]
  %v388 = vld [vmem:[%s2 + $0x2c8] sm:$0xff]
  %v389 = vld [vmem:[%s2 + $0x2d0] sm:$0xff]
  %v390 = vld [vmem:[%s2 + $0x2d8] sm:$0xff]
  %v391 = vld [vmem:[%s2 + $0x2e0] sm:$0xff]
  %v392 = vld [vmem:[%s2 + $0x2e8] sm:$0xff]
  %v393 = vld [vmem:[%s2 + $0x2f0] sm:$0xff]
  %v394 = vld [vmem:[%s2 + $0x2f8] sm:$0xff]
  %v395 = vld [vmem:[%s2 + $0x300] sm:$0xff]
  %v396 = vld [vmem:[%s2 + $0x308] sm:$0xff]
  %v397 = vld [vmem:[%s2 + $0x310] sm:$0xff]
  %v398 = vld [vmem:[%s2 + $0x318] sm:$0xff]
  %v399 = vld [vmem:[%s2 + $0x320] sm:$0xff]
  %v400 = vld [vmem:[%s2 + $0x328] sm:$0xff]
  %v401 = vld [vmem:[%s2 + $0x330] sm:$0xff]
  %v402 = vld [vmem:[%s2 + $0x338] sm:$0xff]
  %v403 = vld [vmem:[%s2 + $0x340] sm:$0xff]
  %v404 = vld [vmem:[%s2 + $0x348] sm:$0xff]
  %v405 = vld [vmem:[%s2 + $0x350] sm:$0xff]
  %v406 = vld [vmem:[%s2 + $0x358] sm:$0xff]
  %v407 = vld [vmem:[%s2 + $0x360] sm:$0xff]
  %v408 = vld [vmem:[%s2 + $0x368] sm:$0xff]
  %v409 = vld [vmem:[%s2 + $0x370] sm:$0xff]
  %v410 = vld [vmem:[%s2 + $0x378] sm:$0xff]
  %v411 = vld [vmem:[%s2 + $0x380] sm:$0xff]
  %v412 = vld [vmem:[%s2 + $0x388] sm:$0xff]
  %v413 = vld [vmem:[%s2 + $0x390] sm:$0xff]
  %v414 = vld [vmem:[%s2 + $0x398] sm:$0xff]
  %v415 = vld [vmem:[%s2 + $0x3a0] sm:$0xff]
  %v416 = vld [vmem:[%s2 + $0x3a8] sm:$0xff]
  %v417 = vld [vmem:[%s2 + $0x3b0] sm:$0xff]
  %v418 = vld [vmem:[%s2 + $0x3b8] sm:$0xff]
  %v419 = vld [vmem:[%s2 + $0x3c0] sm:$0xff]
  %v420 = vld [vmem:[%s2 + $0x3c8] sm:$0xff]
  %v421 = vld [vmem:[%s2 + $0x3d0] sm:$0xff]
  %v422 = vld [vmem:[%s2 + $0x3d8] sm:$0xff]
  %v423 = vld [vmem:[%s2 + $0x3e0] sm:$0xff]
  %v424 = vld [vmem:[%s2 + $0x3e8] sm:$0xff]
  %v425 = vld [vmem:[%s2 + $0x3f0] sm:$0xff]
  %v426 = vld [vmem:[%s2 + $0x3f8] sm:$0xff]
  %v427 = vld [vmem:[%s2 + $0x400] sm:$0xff]
  %v428 = vld [vmem:[%s2 + $0x408] sm:$0xff]
  %v429 = vld [vmem:[%s2 + $0x410] sm:$0xff]
  %v430 = vld [vmem:[%s2 + $0x418] sm:$0xff]
  %v431 = vld [vmem:[%s2 + $0x420] sm:$0xff]
  %v432 = vld [vmem:[%s2 + $0x428] sm:$0xff]
  %v433 = vld [vmem:[%s2 + $0x430] sm:$0xff]
  %v434 = vld [vmem:[%s2 + $0x438] sm:$0xff]
  %v435 = vld [vmem:[%s2 + $0x440] sm:$0xff]
  %v436 = vld [vmem:[%s2 + $0x448] sm:$0xff]
  %v437 = vld [vmem:[%s2 + $0x450] sm:$0xff]
  %v438 = vld [vmem:[%s2 + $0x458] sm:$0xff]
  %v439 = vld [vmem:[%s2 + $0x460] sm:$0xff]
  %v440 = vld [vmem:[%s2 + $0x468] sm:$0xff]
  %v441 = vld [vmem:[%s2 + $0x470] sm:$0xff]
  %v442 = vld [vmem:[%s2 + $0x478] sm:$0xff]
  %v443 = vld [vmem:[%s2 + $0x480] sm:$0xff]
  %v444 = vld [vmem:[%s2 + $0x488] sm:$0xff]
  %v445 = vld [vmem:[%s2 + $0x490] sm:$0xff]
  %v446 = vld [vmem:[%s2 + $0x498] sm:$0xff]
  %v447 = vld [vmem:[%s2 + $0x4a0] sm:$0xff]
  %v448 = vld [vmem:[%s2 + $0x4a8] sm:$0xff]
  %v449 = vld [vmem:[%s2 + $0x4b0] sm:$0xff]
  %v450 = vld [vmem:[%s2 + $0x4b8] sm:$0xff]
  %v451 = vld [vmem:[%s2 + $0x4c0] sm:$0xff]
  %v452 = vld [vmem:[%s2 + $0x4c8] sm:$0xff]
  %v453 = vld [vmem:[%s2 + $0x4d0] sm:$0xff]
  %v454 = vld [vmem:[%s2 + $0x4d8] sm:$0xff]
  %v455 = vld [vmem:[%s2 + $0x4e0] sm:$0xff]
  %v456 = vld [vmem:[%s2 + $0x4e8] sm:$0xff]
  %v457 = vld [vmem:[%s2 + $0x4f0] sm:$0xff]
  %v458 = vld [vmem:[%s2 + $0x4f8] sm:$0xff]
  %v459 = vld [vmem:[%s2 + $0x500] sm:$0xff]
  %v460 = vld [vmem:[%s2 + $0x508] sm:$0xff]
  %v461 = vld [vmem:[%s2 + $0x510] sm:$0xff]
  %v462 = vld [vmem:[%s2 + $0x518] sm:$0xff]
  %v463 = vld [vmem:[%s2 + $0x520] sm:$0xff]
  %v464 = vld [vmem:[%s2 + $0x528] sm:$0xff]
  %v465 = vld [vmem:[%s2 + $0x530] sm:$0xff]
  %v466 = vld [vmem:[%s2 + $0x538] sm:$0xff]
  %v467 = vld [vmem:[%s2 + $0x540] sm:$0xff]
  %v468 = vld [vmem:[%s2 + $0x548] sm:$0xff]
  %v469 = vld [vmem:[%s2 + $0x550] sm:$0xff]
  %v470 = vld [vmem:[%s2 + $0x558] sm:$0xff]
  %v471 = vld [vmem:[%s2 + $0x560] sm:$0xff]
  %v472 = vld [vmem:[%s2 + $0x568] sm:$0xff]
  %v473 = vld [vmem:[%s2 + $0x570] sm:$0xff]
  %v474 = vld [vmem:[%s2 + $0x578] sm:$0xff]
  %v475 = vld [vmem:[%s2 + $0x580] sm:$0xff]
  %v476 = vld [vmem:[%s2 + $0x588] sm:$0xff]
  %v477 = vld [vmem:[%s2 + $0x590] sm:$0xff]
  %v478 = vld [vmem:[%s2 + $0x598] sm:$0xff]
  %v479 = vld [vmem:[%s2 + $0x5a0] sm:$0xff]
  %v480 = vld [vmem:[%s2 + $0x5a8] sm:$0xff]
  %v481 = vld [vmem:[%s2 + $0x5b0] sm:$0xff]
  %v482 = vld [vmem:[%s2 + $0x5b8] sm:$0xff]
  %v483 = vld [vmem:[%s2 + $0x5c0] sm:$0xff]
  %v484 = vld [vmem:[%s2 + $0x5c8] sm:$0xff]
  %v485 = vld [vmem:[%s2 + $0x5d0] sm:$0xff]
  %v486 = vld [vmem:[%s2 + $0x5d8] sm:$0xff]
  %v487 = vld [vmem:[%s2 + $0x5e0] sm:$0xff]
  %v488 = vld [vmem:[%s2 + $0x5e8] sm:$0xff]
  %v489 = vld [vmem:[%s2 + $0x5f0] sm:$0xff]
  %v490 = vld [vmem:[%s2 + $0x5f8] sm:$0xff]
  %v491 = vld [vmem:[%s2 + $0x600] sm:$0xff]
  %v492 = vld [vmem:[%s2 + $0x608] sm:$0xff]
  %v493 = vld [vmem:[%s2 + $0x610] sm:$0xff]
  %v494 = vld [vmem:[%s2 + $0x618] sm:$0xff]
  %v495 = vld [vmem:[%s2 + $0x620] sm:$0xff]
  %v496 = vld [vmem:[%s2 + $0x628] sm:$0xff]
  %v497 = vld [vmem:[%s2 + $0x630] sm:$0xff]
  %v498 = vld [vmem:[%s2 + $0x638] sm:$0xff]
  %v499 = vld [vmem:[%s2 + $0x640] sm:$0xff]
  %v500 = vld [vmem:[%s2 + $0x648] sm:$0xff]
  %v501 = vld [vmem:[%s2 + $0x650] sm:$0xff]
  %v502 = vld [vmem:[%s2 + $0x658] sm:$0xff]
  %v503 = vld [vmem:[%s2 + $0x660] sm:$0xff]
  %v504 = vld [vmem:[%s2 + $0x668] sm:$0xff]
  %v505 = vld [vmem:[%s2 + $0x670] sm:$0xff]
  %v506 = vld [vmem:[%s2 + $0x678] sm:$0xff]
  %v507 = vld [vmem:[%s2 + $0x680] sm:$0xff]
  %v508 = vld [vmem:[%s2 + $0x688] sm:$0xff]
  %v509 = vld [vmem:[%s2 + $0x690] sm:$0xff]
  %v510 = vld [vmem:[%s2 + $0x698] sm:$0xff]
  %v511 = vld [vmem:[%s2 + $0x6a0] sm:$0xff]
  %v512 = vld [vmem:[%s2 + $0x6a8] sm:$0xff]
  %v513 = vld [vmem:[%s2 + $0x6b0] sm:$0xff]
  %v514 = vld [vmem:[%s2 + $0x6b8] sm:$0xff]
  %v515 = vld [vmem:[%s2 + $0x6c0] sm:$0xff]
  %v516 = vld [vmem:[%s2 + $0x6c8] sm:$0xff]
  %v517 = vld [vmem:[%s2 + $0x6d0] sm:$0xff]
  %v518 = vld [vmem:[%s2 + $0x6d8] sm:$0xff]
  %v519 = vld [vmem:[%s2 + $0x6e0] sm:$0xff]
  %v520 = vld [vmem:[%s2 + $0x6e8] sm:$0xff]
  %v521 = vld [vmem:[%s2 + $0x6f0] sm:$0xff]
  %v522 = vld [vmem:[%s2 + $0x6f8] sm:$0xff]
  %v523 = vld [vmem:[%s2 + $0x700] sm:$0xff]
  %v524 = vld [vmem:[%s2 + $0x708] sm:$0xff]
  %v525 = vld [vmem:[%s2 + $0x710] sm:$0xff]
  %v526 = vld [vmem:[%s2 + $0x718] sm:$0xff]
  %v527 = vld [vmem:[%s2 + $0x720] sm:$0xff]
  %v528 = vld [vmem:[%s2 + $0x728] sm:$0xff]
  %v529 = vld [vmem:[%s2 + $0x730] sm:$0xff]
  %v530 = vld [vmem:[%s2 + $0x738] sm:$0xff]
  %v531 = vld [vmem:[%s2 + $0x740] sm:$0xff]
  %v532 = vld [vmem:[%s2 + $0x748] sm:$0xff]
  %v533 = vld [vmem:[%s2 + $0x750] sm:$0xff]
  %v534 = vld [vmem:[%s2 + $0x758] sm:$0xff]
  %v535 = vld [vmem:[%s2 + $0x760] sm:$0xff]
  %v536 = vld [vmem:[%s2 + $0x768] sm:$0xff]
  %v537 = vld [vmem:[%s2 + $0x770] sm:$0xff]
  %v538 = vld [vmem:[%s2 + $0x778] sm:$0xff]
  %v539 = vld [vmem:[%s2 + $0x780] sm:$0xff]
  %v540 = vld [vmem:[%s2 + $0x788] sm:$0xff]
  %v541 = vld [vmem:[%s2 + $0x790] sm:$0xff]
  %v542 = vld [vmem:[%s2 + $0x798] sm:$0xff]
  %v543 = vld [vmem:[%s2 + $0x7a0] sm:$0xff]
  %v544 = vld [vmem:[%s2 + $0x7a8] sm:$0xff]
  %v545 = vld [vmem:[%s2 + $0x7b0] sm:$0xff]
  %v546 = vld [vmem:[%s2 + $0x7b8] sm:$0xff]
  %v547 = vld [vmem:[%s2 + $0x7c0] sm:$0xff]
  %v548 = vld [vmem:[%s2 + $0x7c8] sm:$0xff]
  %v549 = vld [vmem:[%s2 + $0x7d0] sm:$0xff]
  %v550 = vld [vmem:[%s2 + $0x7d8] sm:$0xff]
  %v551 = vld [vmem:[%s2 + $0x7e0] sm:$0xff]
  %v552 = vld [vmem:[%s2 + $0x7e8] sm:$0xff]
  %v553 = vld [vmem:[%s2 + $0x7f0] sm:$0xff]
  %v554 = vld [vmem:[%s2 + $0x7f8] sm:$0xff]
  %v811 = vunpack.c.l.b16 %v299
  %v812 = vunpack.c.h.b16 %v299
  %v813 = vunpack.c.l.b16 %v300
  %v814 = vunpack.c.h.b16 %v300
  %v815 = vunpack.c.l.b16 %v301
  %v816 = vunpack.c.h.b16 %v301
  %v817 = vunpack.c.l.b16 %v302
  %v818 = vunpack.c.h.b16 %v302
  %v819 = vunpack.c.l.b16 %v303
  %v820 = vunpack.c.h.b16 %v303
  %v821 = vunpack.c.l.b16 %v304
  %v822 = vunpack.c.h.b16 %v304
  %v823 = vunpack.c.l.b16 %v305
  %v824 = vunpack.c.h.b16 %v305
  %v825 = vunpack.c.l.b16 %v306
  %v826 = vunpack.c.h.b16 %v306
  %v827 = vunpack.c.l.b16 %v307
  %v828 = vunpack.c.h.b16 %v307
  %v829 = vunpack.c.l.b16 %v308
  %v830 = vunpack.c.h.b16 %v308
  %v831 = vunpack.c.l.b16 %v309
  %v832 = vunpack.c.h.b16 %v309
  %v833 = vunpack.c.l.b16 %v310
  %v834 = vunpack.c.h.b16 %v310
  %v835 = vunpack.c.l.b16 %v311
  %v836 = vunpack.c.h.b16 %v311
  %v837 = vunpack.c.l.b16 %v312
  %v838 = vunpack.c.h.b16 %v312
  %v839 = vunpack.c.l.b16 %v313
  %v840 = vunpack.c.h.b16 %v313
  %v841 = vunpack.c.l.b16 %v314
  %v842 = vunpack.c.h.b16 %v314
  %v843 = vunpack.c.l.b16 %v315
  %v844 = vunpack.c.h.b16 %v315
  %v845 = vunpack.c.l.b16 %v316
  %v846 = vunpack.c.h.b16 %v316
  %v847 = vunpack.c.l.b16 %v317
  %v848 = vunpack.c.h.b16 %v317
  %v849 = vunpack.c.l.b16 %v318
  %v850 = vunpack.c.h.b16 %v318
  %v851 = vunpack.c.l.b16 %v319
  %v852 = vunpack.c.h.b16 %v319
  %v853 = vunpack.c.l.b16 %v320
  %v854 = vunpack.c.h.b16 %v320
  %v855 = vunpack.c.l.b16 %v321
  %v856 = vunpack.c.h.b16 %v321
  %v857 = vunpack.c.l.b16 %v322
  %v858 = vunpack.c.h.b16 %v322
  %v859 = vunpack.c.l.b16 %v323
  %v860 = vunpack.c.h.b16 %v323
  %v861 = vunpack.c.l.b16 %v324
  %v862 = vunpack.c.h.b16 %v324
  %v863 = vunpack.c.l.b16 %v325
  %v864 = vunpack.c.h.b16 %v325
  %v865 = vunpack.c.l.b16 %v326
  %v866 = vunpack.c.h.b16 %v326
  %v867 = vunpack.c.l.b16 %v327
  %v868 = vunpack.c.h.b16 %v327
  %v869 = vunpack.c.l.b16 %v328
  %v870 = vunpack.c.h.b16 %v328
  %v871 = vunpack.c.l.b16 %v329
  %v872 = vunpack.c.h.b16 %v329
  %v873 = vunpack.c.l.b16 %v330
  %v874 = vunpack.c.h.b16 %v330
  %v875 = vunpack.c.l.b16 %v331
  %v876 = vunpack.c.h.b16 %v331
  %v877 = vunpack.c.l.b16 %v332
  %v878 = vunpack.c.h.b16 %v332
  %v879 = vunpack.c.l.b16 %v333
  %v880 = vunpack.c.h.b16 %v333
  %v881 = vunpack.c.l.b16 %v334
  %v882 = vunpack.c.h.b16 %v334
  %v883 = vunpack.c.l.b16 %v335
  %v884 = vunpack.c.h.b16 %v335
  %v885 = vunpack.c.l.b16 %v336
  %v886 = vunpack.c.h.b16 %v336
  %v887 = vunpack.c.l.b16 %v337
  %v888 = vunpack.c.h.b16 %v337
  %v889 = vunpack.c.l.b16 %v338
  %v890 = vunpack.c.h.b16 %v338
  %v891 = vunpack.c.l.b16 %v339
  %v892 = vunpack.c.h.b16 %v339
  %v893 = vunpack.c.l.b16 %v340
  %v894 = vunpack.c.h.b16 %v340
  %v895 = vunpack.c.l.b16 %v341
  %v896 = vunpack.c.h.b16 %v341
  %v897 = vunpack.c.l.b16 %v342
  %v898 = vunpack.c.h.b16 %v342
  %v899 = vunpack.c.l.b16 %v343
  %v900 = vunpack.c.h.b16 %v343
  %v901 = vunpack.c.l.b16 %v344
  %v902 = vunpack.c.h.b16 %v344
  %v903 = vunpack.c.l.b16 %v345
  %v904 = vunpack.c.h.b16 %v345
  %v905 = vunpack.c.l.b16 %v346
  %v906 = vunpack.c.h.b16 %v346
  %v907 = vunpack.c.l.b16 %v347
  %v908 = vunpack.c.h.b16 %v347
  %v909 = vunpack.c.l.b16 %v348
  %v910 = vunpack.c.h.b16 %v348
  %v911 = vunpack.c.l.b16 %v349
  %v912 = vunpack.c.h.b16 %v349
  %v913 = vunpack.c.l.b16 %v350
  %v914 = vunpack.c.h.b16 %v350
  %v915 = vunpack.c.l.b16 %v351
  %v916 = vunpack.c.h.b16 %v351
  %v917 = vunpack.c.l.b16 %v352
  %v918 = vunpack.c.h.b16 %v352
  %v919 = vunpack.c.l.b16 %v353
  %v920 = vunpack.c.h.b16 %v353
  %v921 = vunpack.c.l.b16 %v354
  %v922 = vunpack.c.h.b16 %v354
  %v923 = vunpack.c.l.b16 %v355
  %v924 = vunpack.c.h.b16 %v355
  %v925 = vunpack.c.l.b16 %v356
  %v926 = vunpack.c.h.b16 %v356
  %v927 = vunpack.c.l.b16 %v357
  %v928 = vunpack.c.h.b16 %v357
  %v929 = vunpack.c.l.b16 %v358
  %v930 = vunpack.c.h.b16 %v358
  %v931 = vunpack.c.l.b16 %v359
  %v932 = vunpack.c.h.b16 %v359
  %v933 = vunpack.c.l.b16 %v360
  %v934 = vunpack.c.h.b16 %v360
  %v935 = vunpack.c.l.b16 %v361
  %v936 = vunpack.c.h.b16 %v361
  %v937 = vunpack.c.l.b16 %v362
  %v938 = vunpack.c.h.b16 %v362
  %v939 = vunpack.c.l.b16 %v363
  %v940 = vunpack.c.h.b16 %v363
  %v941 = vunpack.c.l.b16 %v364
  %v942 = vunpack.c.h.b16 %v364
  %v943 = vunpack.c.l.b16 %v365
  %v944 = vunpack.c.h.b16 %v365
  %v945 = vunpack.c.l.b16 %v366
  %v946 = vunpack.c.h.b16 %v366
  %v947 = vunpack.c.l.b16 %v367
  %v948 = vunpack.c.h.b16 %v367
  %v949 = vunpack.c.l.b16 %v368
  %v950 = vunpack.c.h.b16 %v368
  %v951 = vunpack.c.l.b16 %v369
  %v952 = vunpack.c.h.b16 %v369
  %v953 = vunpack.c.l.b16 %v370
  %v954 = vunpack.c.h.b16 %v370
  %v955 = vunpack.c.l.b16 %v371
  %v956 = vunpack.c.h.b16 %v371
  %v957 = vunpack.c.l.b16 %v372
  %v958 = vunpack.c.h.b16 %v372
  %v959 = vunpack.c.l.b16 %v373
  %v960 = vunpack.c.h.b16 %v373
  %v961 = vunpack.c.l.b16 %v374
  %v962 = vunpack.c.h.b16 %v374
  %v963 = vunpack.c.l.b16 %v375
  %v964 = vunpack.c.h.b16 %v375
  %v965 = vunpack.c.l.b16 %v376
  %v966 = vunpack.c.h.b16 %v376
  %v967 = vunpack.c.l.b16 %v377
  %v968 = vunpack.c.h.b16 %v377
  %v969 = vunpack.c.l.b16 %v378
  %v970 = vunpack.c.h.b16 %v378
  %v971 = vunpack.c.l.b16 %v379
  %v972 = vunpack.c.h.b16 %v379
  %v973 = vunpack.c.l.b16 %v380
  %v974 = vunpack.c.h.b16 %v380
  %v975 = vunpack.c.l.b16 %v381
  %v976 = vunpack.c.h.b16 %v381
  %v977 = vunpack.c.l.b16 %v382
  %v978 = vunpack.c.h.b16 %v382
  %v979 = vunpack.c.l.b16 %v383
  %v980 = vunpack.c.h.b16 %v383
  %v981 = vunpack.c.l.b16 %v384
  %v982 = vunpack.c.h.b16 %v384
  %v983 = vunpack.c.l.b16 %v385
  %v984 = vunpack.c.h.b16 %v385
  %v985 = vunpack.c.l.b16 %v386
  %v986 = vunpack.c.h.b16 %v386
  %v987 = vunpack.c.l.b16 %v387
  %v988 = vunpack.c.h.b16 %v387
  %v989 = vunpack.c.l.b16 %v388
  %v990 = vunpack.c.h.b16 %v388
  %v991 = vunpack.c.l.b16 %v389
  %v992 = vunpack.c.h.b16 %v389
  %v993 = vunpack.c.l.b16 %v390
  %v994 = vunpack.c.h.b16 %v390
  %v995 = vunpack.c.l.b16 %v391
  %v996 = vunpack.c.h.b16 %v391
  %v997 = vunpack.c.l.b16 %v392
  %v998 = vunpack.c.h.b16 %v392
  %v999 = vunpack.c.l.b16 %v393
  %v1000 = vunpack.c.h.b16 %v393
  %v1001 = vunpack.c.l.b16 %v394
  %v1002 = vunpack.c.h.b16 %v394
  %v1003 = vunpack.c.l.b16 %v395
  %v1004 = vunpack.c.h.b16 %v395
  %v1005 = vunpack.c.l.b16 %v396
  %v1006 = vunpack.c.h.b16 %v396
  %v1007 = vunpack.c.l.b16 %v397
  %v1008 = vunpack.c.h.b16 %v397
  %v1009 = vunpack.c.l.b16 %v398
  %v1010 = vunpack.c.h.b16 %v398
  %v1011 = vunpack.c.l.b16 %v399
  %v1012 = vunpack.c.h.b16 %v399
  %v1013 = vunpack.c.l.b16 %v400
  %v1014 = vunpack.c.h.b16 %v400
  %v1015 = vunpack.c.l.b16 %v401
  %v1016 = vunpack.c.h.b16 %v401
  %v1017 = vunpack.c.l.b16 %v402
  %v1018 = vunpack.c.h.b16 %v402
  %v1019 = vunpack.c.l.b16 %v403
  %v1020 = vunpack.c.h.b16 %v403
  %v1021 = vunpack.c.l.b16 %v404
  %v1022 = vunpack.c.h.b16 %v404
  %v1023 = vunpack.c.l.b16 %v405
  %v1024 = vunpack.c.h.b16 %v405
  %v1025 = vunpack.c.l.b16 %v406
  %v1026 = vunpack.c.h.b16 %v406
  %v1027 = vunpack.c.l.b16 %v407
  %v1028 = vunpack.c.h.b16 %v407
  %v1029 = vunpack.c.l.b16 %v408
  %v1030 = vunpack.c.h.b16 %v408
  %v1031 = vunpack.c.l.b16 %v409
  %v1032 = vunpack.c.h.b16 %v409
  %v1033 = vunpack.c.l.b16 %v410
  %v1034 = vunpack.c.h.b16 %v410
  %v1035 = vunpack.c.l.b16 %v411
  %v1036 = vunpack.c.h.b16 %v411
  %v1037 = vunpack.c.l.b16 %v412
  %v1038 = vunpack.c.h.b16 %v412
  %v1039 = vunpack.c.l.b16 %v413
  %v1040 = vunpack.c.h.b16 %v413
  %v1041 = vunpack.c.l.b16 %v414
  %v1042 = vunpack.c.h.b16 %v414
  %v1043 = vunpack.c.l.b16 %v415
  %v1044 = vunpack.c.h.b16 %v415
  %v1045 = vunpack.c.l.b16 %v416
  %v1046 = vunpack.c.h.b16 %v416
  %v1047 = vunpack.c.l.b16 %v417
  %v1048 = vunpack.c.h.b16 %v417
  %v1049 = vunpack.c.l.b16 %v418
  %v1050 = vunpack.c.h.b16 %v418
  %v1051 = vunpack.c.l.b16 %v419
  %v1052 = vunpack.c.h.b16 %v419
  %v1053 = vunpack.c.l.b16 %v420
  %v1054 = vunpack.c.h.b16 %v420
  %v1055 = vunpack.c.l.b16 %v421
  %v1056 = vunpack.c.h.b16 %v421
  %v1057 = vunpack.c.l.b16 %v422
  %v1058 = vunpack.c.h.b16 %v422
  %v1059 = vunpack.c.l.b16 %v423
  %v1060 = vunpack.c.h.b16 %v423
  %v1061 = vunpack.c.l.b16 %v424
  %v1062 = vunpack.c.h.b16 %v424
  %v1063 = vunpack.c.l.b16 %v425
  %v1064 = vunpack.c.h.b16 %v425
  %v1065 = vunpack.c.l.b16 %v426
  %v1066 = vunpack.c.h.b16 %v426
  %v1067 = vunpack.c.l.b16 %v427
  %v1068 = vunpack.c.h.b16 %v427
  %v1069 = vunpack.c.l.b16 %v428
  %v1070 = vunpack.c.h.b16 %v428
  %v1071 = vunpack.c.l.b16 %v429
  %v1072 = vunpack.c.h.b16 %v429
  %v1073 = vunpack.c.l.b16 %v430
  %v1074 = vunpack.c.h.b16 %v430
  %v1075 = vunpack.c.l.b16 %v431
  %v1076 = vunpack.c.h.b16 %v431
  %v1077 = vunpack.c.l.b16 %v432
  %v1078 = vunpack.c.h.b16 %v432
  %v1079 = vunpack.c.l.b16 %v433
  %v1080 = vunpack.c.h.b16 %v433
  %v1081 = vunpack.c.l.b16 %v434
  %v1082 = vunpack.c.h.b16 %v434
  %v1083 = vunpack.c.l.b16 %v435
  %v1084 = vunpack.c.h.b16 %v435
  %v1085 = vunpack.c.l.b16 %v436
  %v1086 = vunpack.c.h.b16 %v436
  %v1087 = vunpack.c.l.b16 %v437
  %v1088 = vunpack.c.h.b16 %v437
  %v1089 = vunpack.c.l.b16 %v438
  %v1090 = vunpack.c.h.b16 %v438
  %v1091 = vunpack.c.l.b16 %v439
  %v1092 = vunpack.c.h.b16 %v439
  %v1093 = vunpack.c.l.b16 %v440
  %v1094 = vunpack.c.h.b16 %v440
  %v1095 = vunpack.c.l.b16 %v441
  %v1096 = vunpack.c.h.b16 %v441
  %v1097 = vunpack.c.l.b16 %v442
  %v1098 = vunpack.c.h.b16 %v442
  %v1099 = vunpack.c.l.b16 %v443
  %v1100 = vunpack.c.h.b16 %v443
  %v1101 = vunpack.c.l.b16 %v444
  %v1102 = vunpack.c.h.b16 %v444
  %v1103 = vunpack.c.l.b16 %v445
  %v1104 = vunpack.c.h.b16 %v445
  %v1105 = vunpack.c.l.b16 %v446
  %v1106 = vunpack.c.h.b16 %v446
  %v1107 = vunpack.c.l.b16 %v447
  %v1108 = vunpack.c.h.b16 %v447
  %v1109 = vunpack.c.l.b16 %v448
  %v1110 = vunpack.c.h.b16 %v448
  %v1111 = vunpack.c.l.b16 %v449
  %v1112 = vunpack.c.h.b16 %v449
  %v1113 = vunpack.c.l.b16 %v450
  %v1114 = vunpack.c.h.b16 %v450
  %v1115 = vunpack.c.l.b16 %v451
  %v1116 = vunpack.c.h.b16 %v451
  %v1117 = vunpack.c.l.b16 %v452
  %v1118 = vunpack.c.h.b16 %v452
  %v1119 = vunpack.c.l.b16 %v453
  %v1120 = vunpack.c.h.b16 %v453
  %v1121 = vunpack.c.l.b16 %v454
  %v1122 = vunpack.c.h.b16 %v454
  %v1123 = vunpack.c.l.b16 %v455
  %v1124 = vunpack.c.h.b16 %v455
  %v1125 = vunpack.c.l.b16 %v456
  %v1126 = vunpack.c.h.b16 %v456
  %v1127 = vunpack.c.l.b16 %v457
  %v1128 = vunpack.c.h.b16 %v457
  %v1129 = vunpack.c.l.b16 %v458
  %v1130 = vunpack.c.h.b16 %v458
  %v1131 = vunpack.c.l.b16 %v459
  %v1132 = vunpack.c.h.b16 %v459
  %v1133 = vunpack.c.l.b16 %v460
  %v1134 = vunpack.c.h.b16 %v460
  %v1135 = vunpack.c.l.b16 %v461
  %v1136 = vunpack.c.h.b16 %v461
  %v1137 = vunpack.c.l.b16 %v462
  %v1138 = vunpack.c.h.b16 %v462
  %v1139 = vunpack.c.l.b16 %v463
  %v1140 = vunpack.c.h.b16 %v463
  %v1141 = vunpack.c.l.b16 %v464
  %v1142 = vunpack.c.h.b16 %v464
  %v1143 = vunpack.c.l.b16 %v465
  %v1144 = vunpack.c.h.b16 %v465
  %v1145 = vunpack.c.l.b16 %v466
  %v1146 = vunpack.c.h.b16 %v466
  %v1147 = vunpack.c.l.b16 %v467
  %v1148 = vunpack.c.h.b16 %v467
  %v1149 = vunpack.c.l.b16 %v468
  %v1150 = vunpack.c.h.b16 %v468
  %v1151 = vunpack.c.l.b16 %v469
  %v1152 = vunpack.c.h.b16 %v469
  %v1153 = vunpack.c.l.b16 %v470
  %v1154 = vunpack.c.h.b16 %v470
  %v1155 = vunpack.c.l.b16 %v471
  %v1156 = vunpack.c.h.b16 %v471
  %v1157 = vunpack.c.l.b16 %v472
  %v1158 = vunpack.c.h.b16 %v472
  %v1159 = vunpack.c.l.b16 %v473
  %v1160 = vunpack.c.h.b16 %v473
  %v1161 = vunpack.c.l.b16 %v474
  %v1162 = vunpack.c.h.b16 %v474
  %v1163 = vunpack.c.l.b16 %v475
  %v1164 = vunpack.c.h.b16 %v475
  %v1165 = vunpack.c.l.b16 %v476
  %v1166 = vunpack.c.h.b16 %v476
  %v1167 = vunpack.c.l.b16 %v477
  %v1168 = vunpack.c.h.b16 %v477
  %v1169 = vunpack.c.l.b16 %v478
  %v1170 = vunpack.c.h.b16 %v478
  %v1171 = vunpack.c.l.b16 %v479
  %v1172 = vunpack.c.h.b16 %v479
  %v1173 = vunpack.c.l.b16 %v480
  %v1174 = vunpack.c.h.b16 %v480
  %v1175 = vunpack.c.l.b16 %v481
  %v1176 = vunpack.c.h.b16 %v481
  %v1177 = vunpack.c.l.b16 %v482
  %v1178 = vunpack.c.h.b16 %v482
  %v1179 = vunpack.c.l.b16 %v483
  %v1180 = vunpack.c.h.b16 %v483
  %v1181 = vunpack.c.l.b16 %v484
  %v1182 = vunpack.c.h.b16 %v484
  %v1183 = vunpack.c.l.b16 %v485
  %v1184 = vunpack.c.h.b16 %v485
  %v1185 = vunpack.c.l.b16 %v486
  %v1186 = vunpack.c.h.b16 %v486
  %v1187 = vunpack.c.l.b16 %v487
  %v1188 = vunpack.c.h.b16 %v487
  %v1189 = vunpack.c.l.b16 %v488
  %v1190 = vunpack.c.h.b16 %v488
  %v1191 = vunpack.c.l.b16 %v489
  %v1192 = vunpack.c.h.b16 %v489
  %v1193 = vunpack.c.l.b16 %v490
  %v1194 = vunpack.c.h.b16 %v490
  %v1195 = vunpack.c.l.b16 %v491
  %v1196 = vunpack.c.h.b16 %v491
  %v1197 = vunpack.c.l.b16 %v492
  %v1198 = vunpack.c.h.b16 %v492
  %v1199 = vunpack.c.l.b16 %v493
  %v1200 = vunpack.c.h.b16 %v493
  %v1201 = vunpack.c.l.b16 %v494
  %v1202 = vunpack.c.h.b16 %v494
  %v1203 = vunpack.c.l.b16 %v495
  %v1204 = vunpack.c.h.b16 %v495
  %v1205 = vunpack.c.l.b16 %v496
  %v1206 = vunpack.c.h.b16 %v496
  %v1207 = vunpack.c.l.b16 %v497
  %v1208 = vunpack.c.h.b16 %v497
  %v1209 = vunpack.c.l.b16 %v498
  %v1210 = vunpack.c.h.b16 %v498
  %v1211 = vunpack.c.l.b16 %v499
  %v1212 = vunpack.c.h.b16 %v499
  %v1213 = vunpack.c.l.b16 %v500
  %v1214 = vunpack.c.h.b16 %v500
  %v1215 = vunpack.c.l.b16 %v501
  %v1216 = vunpack.c.h.b16 %v501
  %v1217 = vunpack.c.l.b16 %v502
  %v1218 = vunpack.c.h.b16 %v502
  %v1219 = vunpack.c.l.b16 %v503
  %v1220 = vunpack.c.h.b16 %v503
  %v1221 = vunpack.c.l.b16 %v504
  %v1222 = vunpack.c.h.b16 %v504
  %v1223 = vunpack.c.l.b16 %v505
  %v1224 = vunpack.c.h.b16 %v505
  %v1225 = vunpack.c.l.b16 %v506
  %v1226 = vunpack.c.h.b16 %v506
  %v1227 = vunpack.c.l.b16 %v507
  %v1228 = vunpack.c.h.b16 %v507
  %v1229 = vunpack.c.l.b16 %v508
  %v1230 = vunpack.c.h.b16 %v508
  %v1231 = vunpack.c.l.b16 %v509
  %v1232 = vunpack.c.h.b16 %v509
  %v1233 = vunpack.c.l.b16 %v510
  %v1234 = vunpack.c.h.b16 %v510
  %v1235 = vunpack.c.l.b16 %v511
  %v1236 = vunpack.c.h.b16 %v511
  %v1237 = vunpack.c.l.b16 %v512
  %v1238 = vunpack.c.h.b16 %v512
  %v1239 = vunpack.c.l.b16 %v513
  %v1240 = vunpack.c.h.b16 %v513
  %v1241 = vunpack.c.l.b16 %v514
  %v1242 = vunpack.c.h.b16 %v514
  %v1243 = vunpack.c.l.b16 %v515
  %v1244 = vunpack.c.h.b16 %v515
  %v1245 = vunpack.c.l.b16 %v516
  %v1246 = vunpack.c.h.b16 %v516
  %v1247 = vunpack.c.l.b16 %v517
  %v1248 = vunpack.c.h.b16 %v517
  %v1249 = vunpack.c.l.b16 %v518
  %v1250 = vunpack.c.h.b16 %v518
  %v1251 = vunpack.c.l.b16 %v519
  %v1252 = vunpack.c.h.b16 %v519
  %v1253 = vunpack.c.l.b16 %v520
  %v1254 = vunpack.c.h.b16 %v520
  %v1255 = vunpack.c.l.b16 %v521
  %v1256 = vunpack.c.h.b16 %v521
  %v1257 = vunpack.c.l.b16 %v522
  %v1258 = vunpack.c.h.b16 %v522
  %v1259 = vunpack.c.l.b16 %v523
  %v1260 = vunpack.c.h.b16 %v523
  %v1261 = vunpack.c.l.b16 %v524
  %v1262 = vunpack.c.h.b16 %v524
  %v1263 = vunpack.c.l.b16 %v525
  %v1264 = vunpack.c.h.b16 %v525
  %v1265 = vunpack.c.l.b16 %v526
  %v1266 = vunpack.c.h.b16 %v526
  %v1267 = vunpack.c.l.b16 %v527
  %v1268 = vunpack.c.h.b16 %v527
  %v1269 = vunpack.c.l.b16 %v528
  %v1270 = vunpack.c.h.b16 %v528
  %v1271 = vunpack.c.l.b16 %v529
  %v1272 = vunpack.c.h.b16 %v529
  %v1273 = vunpack.c.l.b16 %v530
  %v1274 = vunpack.c.h.b16 %v530
  %v1275 = vunpack.c.l.b16 %v531
  %v1276 = vunpack.c.h.b16 %v531
  %v1277 = vunpack.c.l.b16 %v532
  %v1278 = vunpack.c.h.b16 %v532
  %v1279 = vunpack.c.l.b16 %v533
  %v1280 = vunpack.c.h.b16 %v533
  %v1281 = vunpack.c.l.b16 %v534
  %v1282 = vunpack.c.h.b16 %v534
  %v1283 = vunpack.c.l.b16 %v535
  %v1284 = vunpack.c.h.b16 %v535
  %v1285 = vunpack.c.l.b16 %v536
  %v1286 = vunpack.c.h.b16 %v536
  %v1287 = vunpack.c.l.b16 %v537
  %v1288 = vunpack.c.h.b16 %v537
  %v1289 = vunpack.c.l.b16 %v538
  %v1290 = vunpack.c.h.b16 %v538
  %v1291 = vunpack.c.l.b16 %v539
  %v1292 = vunpack.c.h.b16 %v539
  %v1293 = vunpack.c.l.b16 %v540
  %v1294 = vunpack.c.h.b16 %v540
  %v1295 = vunpack.c.l.b16 %v541
  %v1296 = vunpack.c.h.b16 %v541
  %v1297 = vunpack.c.l.b16 %v542
  %v1298 = vunpack.c.h.b16 %v542
  %v1299 = vunpack.c.l.b16 %v543
  %v1300 = vunpack.c.h.b16 %v543
  %v1301 = vunpack.c.l.b16 %v544
  %v1302 = vunpack.c.h.b16 %v544
  %v1303 = vunpack.c.l.b16 %v545
  %v1304 = vunpack.c.h.b16 %v545
  %v1305 = vunpack.c.l.b16 %v546
  %v1306 = vunpack.c.h.b16 %v546
  %v1307 = vunpack.c.l.b16 %v547
  %v1308 = vunpack.c.h.b16 %v547
  %v1309 = vunpack.c.l.b16 %v548
  %v1310 = vunpack.c.h.b16 %v548
  %v1311 = vunpack.c.l.b16 %v549
  %v1312 = vunpack.c.h.b16 %v549
  %v1313 = vunpack.c.l.b16 %v550
  %v1314 = vunpack.c.h.b16 %v550
  %v1315 = vunpack.c.l.b16 %v551
  %v1316 = vunpack.c.h.b16 %v551
  %v1317 = vunpack.c.l.b16 %v552
  %v1318 = vunpack.c.h.b16 %v552
  %v1319 = vunpack.c.l.b16 %v553
  %v1320 = vunpack.c.h.b16 %v553
  %v1321 = vunpack.c.l.b16 %v554
  %v1322 = vunpack.c.h.b16 %v554
  %v1323 = vpack.c.b16 %v813, %v811
  %v1324 = vpack.c.b16 %v814, %v812
  %v1325 = vpack.c.b16 %v817, %v815
  %v1326 = vpack.c.b16 %v818, %v816
  %v1327 = vpack.c.b16 %v821, %v819
  %v1328 = vpack.c.b16 %v822, %v820
  %v1329 = vpack.c.b16 %v825, %v823
  %v1330 = vpack.c.b16 %v826, %v824
  %v1331 = vpack.c.b16 %v829, %v827
  %v1332 = vpack.c.b16 %v830, %v828
  %v1333 = vpack.c.b16 %v833, %v831
  %v1334 = vpack.c.b16 %v834, %v832
  %v1335 = vpack.c.b16 %v837, %v835
  %v1336 = vpack.c.b16 %v838, %v836
  %v1337 = vpack.c.b16 %v841, %v839
  %v1338 = vpack.c.b16 %v842, %v840
  %v1339 = vpack.c.b16 %v845, %v843
  %v1340 = vpack.c.b16 %v846, %v844
  %v1341 = vpack.c.b16 %v849, %v847
  %v1342 = vpack.c.b16 %v850, %v848
  %v1343 = vpack.c.b16 %v853, %v851
  %v1344 = vpack.c.b16 %v854, %v852
  %v1345 = vpack.c.b16 %v857, %v855
  %v1346 = vpack.c.b16 %v858, %v856
  %v1347 = vpack.c.b16 %v861, %v859
  %v1348 = vpack.c.b16 %v862, %v860
  %v1349 = vpack.c.b16 %v865, %v863
  %v1350 = vpack.c.b16 %v866, %v864
  %v1351 = vpack.c.b16 %v869, %v867
  %v1352 = vpack.c.b16 %v870, %v868
  %v1353 = vpack.c.b16 %v873, %v871
  %v1354 = vpack.c.b16 %v874, %v872
  %v1355 = vpack.c.b16 %v877, %v875
  %v1356 = vpack.c.b16 %v878, %v876
  %v1357 = vpack.c.b16 %v881, %v879
  %v1358 = vpack.c.b16 %v882, %v880
  %v1359 = vpack.c.b16 %v885, %v883
  %v1360 = vpack.c.b16 %v886, %v884
  %v1361 = vpack.c.b16 %v889, %v887
  %v1362 = vpack.c.b16 %v890, %v888
  %v1363 = vpack.c.b16 %v893, %v891
  %v1364 = vpack.c.b16 %v894, %v892
  %v1365 = vpack.c.b16 %v897, %v895
  %v1366 = vpack.c.b16 %v898, %v896
  %v1367 = vpack.c.b16 %v901, %v899
  %v1368 = vpack.c.b16 %v902, %v900
  %v1369 = vpack.c.b16 %v905, %v903
  %v1370 = vpack.c.b16 %v906, %v904
  %v1371 = vpack.c.b16 %v909, %v907
  %v1372 = vpack.c.b16 %v910, %v908
  %v1373 = vpack.c.b16 %v913, %v911
  %v1374 = vpack.c.b16 %v914, %v912
  %v1375 = vpack.c.b16 %v917, %v915
  %v1376 = vpack.c.b16 %v918, %v916
  %v1377 = vpack.c.b16 %v921, %v919
  %v1378 = vpack.c.b16 %v922, %v920
  %v1379 = vpack.c.b16 %v925, %v923
  %v1380 = vpack.c.b16 %v926, %v924
  %v1381 = vpack.c.b16 %v929, %v927
  %v1382 = vpack.c.b16 %v930, %v928
  %v1383 = vpack.c.b16 %v933, %v931
  %v1384 = vpack.c.b16 %v934, %v932
  %v1385 = vpack.c.b16 %v937, %v935
  %v1386 = vpack.c.b16 %v938, %v936
  %v1387 = vpack.c.b16 %v941, %v939
  %v1388 = vpack.c.b16 %v942, %v940
  %v1389 = vpack.c.b16 %v945, %v943
  %v1390 = vpack.c.b16 %v946, %v944
  %v1391 = vpack.c.b16 %v949, %v947
  %v1392 = vpack.c.b16 %v950, %v948
  %v1393 = vpack.c.b16 %v953, %v951
  %v1394 = vpack.c.b16 %v954, %v952
  %v1395 = vpack.c.b16 %v957, %v955
  %v1396 = vpack.c.b16 %v958, %v956
  %v1397 = vpack.c.b16 %v961, %v959
  %v1398 = vpack.c.b16 %v962, %v960
  %v1399 = vpack.c.b16 %v965, %v963
  %v1400 = vpack.c.b16 %v966, %v964
  %v1401 = vpack.c.b16 %v969, %v967
  %v1402 = vpack.c.b16 %v970, %v968
  %v1403 = vpack.c.b16 %v973, %v971
  %v1404 = vpack.c.b16 %v974, %v972
  %v1405 = vpack.c.b16 %v977, %v975
  %v1406 = vpack.c.b16 %v978, %v976
  %v1407 = vpack.c.b16 %v981, %v979
  %v1408 = vpack.c.b16 %v982, %v980
  %v1409 = vpack.c.b16 %v985, %v983
  %v1410 = vpack.c.b16 %v986, %v984
  %v1411 = vpack.c.b16 %v989, %v987
  %v1412 = vpack.c.b16 %v990, %v988
  %v1413 = vpack.c.b16 %v993, %v991
  %v1414 = vpack.c.b16 %v994, %v992
  %v1415 = vpack.c.b16 %v997, %v995
  %v1416 = vpack.c.b16 %v998, %v996
  %v1417 = vpack.c.b16 %v1001, %v999
  %v1418 = vpack.c.b16 %v1002, %v1000
  %v1419 = vpack.c.b16 %v1005, %v1003
  %v1420 = vpack.c.b16 %v1006, %v1004
  %v1421 = vpack.c.b16 %v1009, %v1007
  %v1422 = vpack.c.b16 %v1010, %v1008
  %v1423 = vpack.c.b16 %v1013, %v1011
  %v1424 = vpack.c.b16 %v1014, %v1012
  %v1425 = vpack.c.b16 %v1017, %v1015
  %v1426 = vpack.c.b16 %v1018, %v1016
  %v1427 = vpack.c.b16 %v1021, %v1019
  %v1428 = vpack.c.b16 %v1022, %v1020
  %v1429 = vpack.c.b16 %v1025, %v1023
  %v1430 = vpack.c.b16 %v1026, %v1024
  %v1431 = vpack.c.b16 %v1029, %v1027
  %v1432 = vpack.c.b16 %v1030, %v1028
  %v1433 = vpack.c.b16 %v1033, %v1031
  %v1434 = vpack.c.b16 %v1034, %v1032
  %v1435 = vpack.c.b16 %v1037, %v1035
  %v1436 = vpack.c.b16 %v1038, %v1036
  %v1437 = vpack.c.b16 %v1041, %v1039
  %v1438 = vpack.c.b16 %v1042, %v1040
  %v1439 = vpack.c.b16 %v1045, %v1043
  %v1440 = vpack.c.b16 %v1046, %v1044
  %v1441 = vpack.c.b16 %v1049, %v1047
  %v1442 = vpack.c.b16 %v1050, %v1048
  %v1443 = vpack.c.b16 %v1053, %v1051
  %v1444 = vpack.c.b16 %v1054, %v1052
  %v1445 = vpack.c.b16 %v1057, %v1055
  %v1446 = vpack.c.b16 %v1058, %v1056
  %v1447 = vpack.c.b16 %v1061, %v1059
  %v1448 = vpack.c.b16 %v1062, %v1060
  %v1449 = vpack.c.b16 %v1065, %v1063
  %v1450 = vpack.c.b16 %v1066, %v1064
  %v1451 = vpack.c.b16 %v1069, %v1067
  %v1452 = vpack.c.b16 %v1070, %v1068
  %v1453 = vpack.c.b16 %v1073, %v1071
  %v1454 = vpack.c.b16 %v1074, %v1072
  %v1455 = vpack.c.b16 %v1077, %v1075
  %v1456 = vpack.c.b16 %v1078, %v1076
  %v1457 = vpack.c.b16 %v1081, %v1079
  %v1458 = vpack.c.b16 %v1082, %v1080
  %v1459 = vpack.c.b16 %v1085, %v1083
  %v1460 = vpack.c.b16 %v1086, %v1084
  %v1461 = vpack.c.b16 %v1089, %v1087
  %v1462 = vpack.c.b16 %v1090, %v1088
  %v1463 = vpack.c.b16 %v1093, %v1091
  %v1464 = vpack.c.b16 %v1094, %v1092
  %v1465 = vpack.c.b16 %v1097, %v1095
  %v1466 = vpack.c.b16 %v1098, %v1096
  %v1467 = vpack.c.b16 %v1101, %v1099
  %v1468 = vpack.c.b16 %v1102, %v1100
  %v1469 = vpack.c.b16 %v1105, %v1103
  %v1470 = vpack.c.b16 %v1106, %v1104
  %v1471 = vpack.c.b16 %v1109, %v1107
  %v1472 = vpack.c.b16 %v1110, %v1108
  %v1473 = vpack.c.b16 %v1113, %v1111
  %v1474 = vpack.c.b16 %v1114, %v1112
  %v1475 = vpack.c.b16 %v1117, %v1115
  %v1476 = vpack.c.b16 %v1118, %v1116
  %v1477 = vpack.c.b16 %v1121, %v1119
  %v1478 = vpack.c.b16 %v1122, %v1120
  %v1479 = vpack.c.b16 %v1125, %v1123
  %v1480 = vpack.c.b16 %v1126, %v1124
  %v1481 = vpack.c.b16 %v1129, %v1127
  %v1482 = vpack.c.b16 %v1130, %v1128
  %v1483 = vpack.c.b16 %v1133, %v1131
  %v1484 = vpack.c.b16 %v1134, %v1132
  %v1485 = vpack.c.b16 %v1137, %v1135
  %v1486 = vpack.c.b16 %v1138, %v1136
  %v1487 = vpack.c.b16 %v1141, %v1139
  %v1488 = vpack.c.b16 %v1142, %v1140
  %v1489 = vpack.c.b16 %v1145, %v1143
  %v1490 = vpack.c.b16 %v1146, %v1144
  %v1491 = vpack.c.b16 %v1149, %v1147
  %v1492 = vpack.c.b16 %v1150, %v1148
  %v1493 = vpack.c.b16 %v1153, %v1151
  %v1494 = vpack.c.b16 %v1154, %v1152
  %v1495 = vpack.c.b16 %v1157, %v1155
  %v1496 = vpack.c.b16 %v1158, %v1156
  %v1497 = vpack.c.b16 %v1161, %v1159
  %v1498 = vpack.c.b16 %v1162, %v1160
  %v1499 = vpack.c.b16 %v1165, %v1163
  %v1500 = vpack.c.b16 %v1166, %v1164
  %v1501 = vpack.c.b16 %v1169, %v1167
  %v1502 = vpack.c.b16 %v1170, %v1168
  %v1503 = vpack.c.b16 %v1173, %v1171
  %v1504 = vpack.c.b16 %v1174, %v1172
  %v1505 = vpack.c.b16 %v1177, %v1175
  %v1506 = vpack.c.b16 %v1178, %v1176
  %v1507 = vpack.c.b16 %v1181, %v1179
  %v1508 = vpack.c.b16 %v1182, %v1180
  %v1509 = vpack.c.b16 %v1185, %v1183
  %v1510 = vpack.c.b16 %v1186, %v1184
  %v1511 = vpack.c.b16 %v1189, %v1187
  %v1512 = vpack.c.b16 %v1190, %v1188
  %v1513 = vpack.c.b16 %v1193, %v1191
  %v1514 = vpack.c.b16 %v1194, %v1192
  %v1515 = vpack.c.b16 %v1197, %v1195
  %v1516 = vpack.c.b16 %v1198, %v1196
  %v1517 = vpack.c.b16 %v1201, %v1199
  %v1518 = vpack.c.b16 %v1202, %v1200
  %v1519 = vpack.c.b16 %v1205, %v1203
  %v1520 = vpack.c.b16 %v1206, %v1204
  %v1521 = vpack.c.b16 %v1209, %v1207
  %v1522 = vpack.c.b16 %v1210, %v1208
  %v1523 = vpack.c.b16 %v1213, %v1211
  %v1524 = vpack.c.b16 %v1214, %v1212
  %v1525 = vpack.c.b16 %v1217, %v1215
  %v1526 = vpack.c.b16 %v1218, %v1216
  %v1527 = vpack.c.b16 %v1221, %v1219
  %v1528 = vpack.c.b16 %v1222, %v1220
  %v1529 = vpack.c.b16 %v1225, %v1223
  %v1530 = vpack.c.b16 %v1226, %v1224
  %v1531 = vpack.c.b16 %v1229, %v1227
  %v1532 = vpack.c.b16 %v1230, %v1228
  %v1533 = vpack.c.b16 %v1233, %v1231
  %v1534 = vpack.c.b16 %v1234, %v1232
  %v1535 = vpack.c.b16 %v1237, %v1235
  %v1536 = vpack.c.b16 %v1238, %v1236
  %v1537 = vpack.c.b16 %v1241, %v1239
  %v1538 = vpack.c.b16 %v1242, %v1240
  %v1539 = vpack.c.b16 %v1245, %v1243
  %v1540 = vpack.c.b16 %v1246, %v1244
  %v1541 = vpack.c.b16 %v1249, %v1247
  %v1542 = vpack.c.b16 %v1250, %v1248
  %v1543 = vpack.c.b16 %v1253, %v1251
  %v1544 = vpack.c.b16 %v1254, %v1252
  %v1545 = vpack.c.b16 %v1257, %v1255
  %v1546 = vpack.c.b16 %v1258, %v1256
  %v1547 = vpack.c.b16 %v1261, %v1259
  %v1548 = vpack.c.b16 %v1262, %v1260
  %v1549 = vpack.c.b16 %v1265, %v1263
  %v1550 = vpack.c.b16 %v1266, %v1264
  %v1551 = vpack.c.b16 %v1269, %v1267
  %v1552 = vpack.c.b16 %v1270, %v1268
  %v1553 = vpack.c.b16 %v1273, %v1271
  %v1554 = vpack.c.b16 %v1274, %v1272
  %v1555 = vpack.c.b16 %v1277, %v1275
  %v1556 = vpack.c.b16 %v1278, %v1276
  %v1557 = vpack.c.b16 %v1281, %v1279
  %v1558 = vpack.c.b16 %v1282, %v1280
  %v1559 = vpack.c.b16 %v1285, %v1283
  %v1560 = vpack.c.b16 %v1286, %v1284
  %v1561 = vpack.c.b16 %v1289, %v1287
  %v1562 = vpack.c.b16 %v1290, %v1288
  %v1563 = vpack.c.b16 %v1293, %v1291
  %v1564 = vpack.c.b16 %v1294, %v1292
  %v1565 = vpack.c.b16 %v1297, %v1295
  %v1566 = vpack.c.b16 %v1298, %v1296
  %v1567 = vpack.c.b16 %v1301, %v1299
  %v1568 = vpack.c.b16 %v1302, %v1300
  %v1569 = vpack.c.b16 %v1305, %v1303
  %v1570 = vpack.c.b16 %v1306, %v1304
  %v1571 = vpack.c.b16 %v1309, %v1307
  %v1572 = vpack.c.b16 %v1310, %v1308
  %v1573 = vpack.c.b16 %v1313, %v1311
  %v1574 = vpack.c.b16 %v1314, %v1312
  %v1575 = vpack.c.b16 %v1317, %v1315
  %v1576 = vpack.c.b16 %v1318, %v1316
  %v1577 = vpack.c.b16 %v1321, %v1319
  %v1578 = vpack.c.b16 %v1322, %v1320
  %1835 = vmatprep.subr.bf16.mxu0 %v1324
  %1836 = vmatpush1.bf16.msra.mxu0 %v1323
  %1837 = vmatprep.subr.bf16.mxu0 %v1326
  %1838 = vmatpush1.bf16.msra.mxu0 %v1325
  %1839 = vmatprep.subr.bf16.mxu0 %v1328
  %1840 = vmatpush1.bf16.msra.mxu0 %v1327
  %1841 = vmatprep.subr.bf16.mxu0 %v1330
  %1842 = vmatpush1.bf16.msra.mxu0 %v1329
  %1843 = vmatprep.subr.bf16.mxu0 %v1332
  %1844 = vmatpush1.bf16.msra.mxu0 %v1331
  %1845 = vmatprep.subr.bf16.mxu0 %v1334
  %1846 = vmatpush1.bf16.msra.mxu0 %v1333
  %1847 = vmatprep.subr.bf16.mxu0 %v1336
  %1848 = vmatpush1.bf16.msra.mxu0 %v1335
  %1849 = vmatprep.subr.bf16.mxu0 %v1338
  %1850 = vmatpush1.bf16.msra.mxu0 %v1337
  %1851 = vmatprep.subr.bf16.mxu0 %v1340
  %1852 = vmatpush1.bf16.msra.mxu0 %v1339
  %1853 = vmatprep.subr.bf16.mxu0 %v1342
  %1854 = vmatpush1.bf16.msra.mxu0 %v1341
  %1855 = vmatprep.subr.bf16.mxu0 %v1344
  %1856 = vmatpush1.bf16.msra.mxu0 %v1343
  %1857 = vmatprep.subr.bf16.mxu0 %v1346
  %1858 = vmatpush1.bf16.msra.mxu0 %v1345
  %1859 = vmatprep.subr.bf16.mxu0 %v1348
  %1860 = vmatpush1.bf16.msra.mxu0 %v1347
  %1861 = vmatprep.subr.bf16.mxu0 %v1350
  %1862 = vmatpush1.bf16.msra.mxu0 %v1349
  %1863 = vmatprep.subr.bf16.mxu0 %v1352
  %1864 = vmatpush1.bf16.msra.mxu0 %v1351
  %1865 = vmatprep.subr.bf16.mxu0 %v1354
  %1866 = vmatpush1.bf16.msra.mxu0 %v1353
  %1867 = vmatprep.mubr.bf16.mxu0 %v284
  %1868 = vmatmul.mubr.bf16.gmra.mrb[0].mxu0 %v283
  %v1869 = vpop.f32.mrb[0].mxu0
  %v1870 = vadd.f32 0.0, %v1869
  %v1871 = vpop.f32.mrb[0].mxu0
  %v1872 = vadd.f32 0.0, %v1871
  %v1873 = vpop.f32.mrb[0].mxu0
  %v1874 = vpop.f32.mrb[0].mxu0
  %1875 = vdwg.mxu0
  %1876 = vmatprep.subr.bf16.mxu0 %v1356
  %1877 = vmatpush1.bf16.msra.mxu0 %v1355
  %1878 = vmatprep.subr.bf16.mxu0 %v1358
  %1879 = vmatpush1.bf16.msra.mxu0 %v1357
  %1880 = vmatprep.subr.bf16.mxu0 %v1360
  %1881 = vmatpush1.bf16.msra.mxu0 %v1359
  %1882 = vmatprep.subr.bf16.mxu0 %v1362
  %1883 = vmatpush1.bf16.msra.mxu0 %v1361
  %1884 = vmatprep.subr.bf16.mxu0 %v1364
  %1885 = vmatpush1.bf16.msra.mxu0 %v1363
  %1886 = vmatprep.subr.bf16.mxu0 %v1366
  %1887 = vmatpush1.bf16.msra.mxu0 %v1365
  %1888 = vmatprep.subr.bf16.mxu0 %v1368
  %1889 = vmatpush1.bf16.msra.mxu0 %v1367
  %1890 = vmatprep.subr.bf16.mxu0 %v1370
  %1891 = vmatpush1.bf16.msra.mxu0 %v1369
  %1892 = vmatprep.subr.bf16.mxu0 %v1372
  %1893 = vmatpush1.bf16.msra.mxu0 %v1371
  %1894 = vmatprep.subr.bf16.mxu0 %v1374
  %1895 = vmatpush1.bf16.msra.mxu0 %v1373
  %1896 = vmatprep.subr.bf16.mxu0 %v1376
  %1897 = vmatpush1.bf16.msra.mxu0 %v1375
  %1898 = vmatprep.subr.bf16.mxu0 %v1378
  %1899 = vmatpush1.bf16.msra.mxu0 %v1377
  %1900 = vmatprep.subr.bf16.mxu0 %v1380
  %1901 = vmatpush1.bf16.msra.mxu0 %v1379
  %1902 = vmatprep.subr.bf16.mxu0 %v1382
  %1903 = vmatpush1.bf16.msra.mxu0 %v1381
  %1904 = vmatprep.subr.bf16.mxu0 %v1384
  %1905 = vmatpush1.bf16.msra.mxu0 %v1383
  %1906 = vmatprep.subr.bf16.mxu0 %v1386
  %1907 = vmatpush1.bf16.msra.mxu0 %v1385
  %1908 = vmatprep.mubr.bf16.mxu0 %v286
  %1909 = vmatmul.mubr.bf16.gmra.mrb[0].mxu0 %v285
  %v1910 = vpop.f32.mrb[0].mxu0
  %v1911 = vadd.f32 %v1870, %v1910
  %v1912 = vpop.f32.mrb[0].mxu0
  %v1913 = vadd.f32 %v1872, %v1912
  %v1914 = vpop.f32.mrb[0].mxu0
  %v1915 = vpop.f32.mrb[0].mxu0
  %1916 = vdwg.mxu0
  %1917 = vmatprep.subr.bf16.mxu0 %v1388
  %1918 = vmatpush1.bf16.msra.mxu0 %v1387
  %1919 = vmatprep.subr.bf16.mxu0 %v1390
  %1920 = vmatpush1.bf16.msra.mxu0 %v1389
  %1921 = vmatprep.subr.bf16.mxu0 %v1392
  %1922 = vmatpush1.bf16.msra.mxu0 %v1391
  %1923 = vmatprep.subr.bf16.mxu0 %v1394
  %1924 = vmatpush1.bf16.msra.mxu0 %v1393
  %1925 = vmatprep.subr.bf16.mxu0 %v1396
  %1926 = vmatpush1.bf16.msra.mxu0 %v1395
  %1927 = vmatprep.subr.bf16.mxu0 %v1398
  %1928 = vmatpush1.bf16.msra.mxu0 %v1397
  %1929 = vmatprep.subr.bf16.mxu0 %v1400
  %1930 = vmatpush1.bf16.msra.mxu0 %v1399
  %1931 = vmatprep.subr.bf16.mxu0 %v1402
  %1932 = vmatpush1.bf16.msra.mxu0 %v1401
  %1933 = vmatprep.subr.bf16.mxu0 %v1404
  %1934 = vmatpush1.bf16.msra.mxu0 %v1403
  %1935 = vmatprep.subr.bf16.mxu0 %v1406
  %1936 = vmatpush1.bf16.msra.mxu0 %v1405
  %1937 = vmatprep.subr.bf16.mxu0 %v1408
  %1938 = vmatpush1.bf16.msra.mxu0 %v1407
  %1939 = vmatprep.subr.bf16.mxu0 %v1410
  %1940 = vmatpush1.bf16.msra.mxu0 %v1409
  %1941 = vmatprep.subr.bf16.mxu0 %v1412
  %1942 = vmatpush1.bf16.msra.mxu0 %v1411
  %1943 = vmatprep.subr.bf16.mxu0 %v1414
  %1944 = vmatpush1.bf16.msra.mxu0 %v1413
  %1945 = vmatprep.subr.bf16.mxu0 %v1416
  %1946 = vmatpush1.bf16.msra.mxu0 %v1415
  %1947 = vmatprep.subr.bf16.mxu0 %v1418
  %1948 = vmatpush1.bf16.msra.mxu0 %v1417
  %1949 = vmatprep.mubr.bf16.mxu0 %v288
  %1950 = vmatmul.mubr.bf16.gmra.mrb[0].mxu0 %v287
  %v1951 = vpop.f32.mrb[0].mxu0
  %v1952 = vadd.f32 %v1911, %v1951
  %v1953 = vpop.f32.mrb[0].mxu0
  %v1954 = vadd.f32 %v1913, %v1953
  %v1955 = vpop.f32.mrb[0].mxu0
  %v1956 = vpop.f32.mrb[0].mxu0
  %1957 = vdwg.mxu0
  %1958 = vmatprep.subr.bf16.mxu0 %v1420
  %1959 = vmatpush1.bf16.msra.mxu0 %v1419
  %1960 = vmatprep.subr.bf16.mxu0 %v1422
  %1961 = vmatpush1.bf16.msra.mxu0 %v1421
  %1962 = vmatprep.subr.bf16.mxu0 %v1424
  %1963 = vmatpush1.bf16.msra.mxu0 %v1423
  %1964 = vmatprep.subr.bf16.mxu0 %v1426
  %1965 = vmatpush1.bf16.msra.mxu0 %v1425
  %1966 = vmatprep.subr.bf16.mxu0 %v1428
  %1967 = vmatpush1.bf16.msra.mxu0 %v1427
  %1968 = vmatprep.subr.bf16.mxu0 %v1430
  %1969 = vmatpush1.bf16.msra.mxu0 %v1429
  %1970 = vmatprep.subr.bf16.mxu0 %v1432
  %1971 = vmatpush1.bf16.msra.mxu0 %v1431
  %1972 = vmatprep.subr.bf16.mxu0 %v1434
  %1973 = vmatpush1.bf16.msra.mxu0 %v1433
  %1974 = vmatprep.subr.bf16.mxu0 %v1436
  %1975 = vmatpush1.bf16.msra.mxu0 %v1435
  %1976 = vmatprep.subr.bf16.mxu0 %v1438
  %1977 = vmatpush1.bf16.msra.mxu0 %v1437
  %1978 = vmatprep.subr.bf16.mxu0 %v1440
  %1979 = vmatpush1.bf16.msra.mxu0 %v1439
  %1980 = vmatprep.subr.bf16.mxu0 %v1442
  %1981 = vmatpush1.bf16.msra.mxu0 %v1441
  %1982 = vmatprep.subr.bf16.mxu0 %v1444
  %1983 = vmatpush1.bf16.msra.mxu0 %v1443
  %1984 = vmatprep.subr.bf16.mxu0 %v1446
  %1985 = vmatpush1.bf16.msra.mxu0 %v1445
  %1986 = vmatprep.subr.bf16.mxu0 %v1448
  %1987 = vmatpush1.bf16.msra.mxu0 %v1447
  %1988 = vmatprep.subr.bf16.mxu0 %v1450
  %1989 = vmatpush1.bf16.msra.mxu0 %v1449
  %1990 = vmatprep.mubr.bf16.mxu0 %v290
  %1991 = vmatmul.mubr.bf16.gmra.mrb[0].mxu0 %v289
  %v1992 = vpop.f32.mrb[0].mxu0
  %v1993 = vadd.f32 %v1952, %v1992
  %v1994 = vpop.f32.mrb[0].mxu0
  %v1995 = vadd.f32 %v1954, %v1994
  %v1996 = vpop.f32.mrb[0].mxu0
  %v1997 = vpop.f32.mrb[0].mxu0
  %1998 = vdwg.mxu0
  %1999 = vmatprep.subr.bf16.mxu0 %v1452
  %2000 = vmatpush1.bf16.msra.mxu0 %v1451
  %2001 = vmatprep.subr.bf16.mxu0 %v1454
  %2002 = vmatpush1.bf16.msra.mxu0 %v1453
  %2003 = vmatprep.subr.bf16.mxu0 %v1456
  %2004 = vmatpush1.bf16.msra.mxu0 %v1455
  %2005 = vmatprep.subr.bf16.mxu0 %v1458
  %2006 = vmatpush1.bf16.msra.mxu0 %v1457
  %2007 = vmatprep.subr.bf16.mxu0 %v1460
  %2008 = vmatpush1.bf16.msra.mxu0 %v1459
  %2009 = vmatprep.subr.bf16.mxu0 %v1462
  %2010 = vmatpush1.bf16.msra.mxu0 %v1461
  %2011 = vmatprep.subr.bf16.mxu0 %v1464
  %2012 = vmatpush1.bf16.msra.mxu0 %v1463
  %2013 = vmatprep.subr.bf16.mxu0 %v1466
  %2014 = vmatpush1.bf16.msra.mxu0 %v1465
  %2015 = vmatprep.subr.bf16.mxu0 %v1468
  %2016 = vmatpush1.bf16.msra.mxu0 %v1467
  %2017 = vmatprep.subr.bf16.mxu0 %v1470
  %2018 = vmatpush1.bf16.msra.mxu0 %v1469
  %2019 = vmatprep.subr.bf16.mxu0 %v1472
  %2020 = vmatpush1.bf16.msra.mxu0 %v1471
  %2021 = vmatprep.subr.bf16.mxu0 %v1474
  %2022 = vmatpush1.bf16.msra.mxu0 %v1473
  %2023 = vmatprep.subr.bf16.mxu0 %v1476
  %2024 = vmatpush1.bf16.msra.mxu0 %v1475
  %2025 = vmatprep.subr.bf16.mxu0 %v1478
  %2026 = vmatpush1.bf16.msra.mxu0 %v1477
  %2027 = vmatprep.subr.bf16.mxu0 %v1480
  %2028 = vmatpush1.bf16.msra.mxu0 %v1479
  %2029 = vmatprep.subr.bf16.mxu0 %v1482
  %2030 = vmatpush1.bf16.msra.mxu0 %v1481
  %2031 = vmatprep.mubr.bf16.mxu0 %v292
  %2032 = vmatmul.mubr.bf16.gmra.mrb[0].mxu0 %v291
  %v2033 = vpop.f32.mrb[0].mxu0
  %v2034 = vadd.f32 %v1993, %v2033
  %v2035 = vpop.f32.mrb[0].mxu0
  %v2036 = vadd.f32 %v1995, %v2035
  %v2037 = vpop.f32.mrb[0].mxu0
  %v2038 = vpop.f32.mrb[0].mxu0
  %2039 = vdwg.mxu0
  %2040 = vmatprep.subr.bf16.mxu0 %v1484
  %2041 = vmatpush1.bf16.msra.mxu0 %v1483
  %2042 = vmatprep.subr.bf16.mxu0 %v1486
  %2043 = vmatpush1.bf16.msra.mxu0 %v1485
  %2044 = vmatprep.subr.bf16.mxu0 %v1488
  %2045 = vmatpush1.bf16.msra.mxu0 %v1487
  %2046 = vmatprep.subr.bf16.mxu0 %v1490
  %2047 = vmatpush1.bf16.msra.mxu0 %v1489
  %2048 = vmatprep.subr.bf16.mxu0 %v1492
  %2049 = vmatpush1.bf16.msra.mxu0 %v1491
  %2050 = vmatprep.subr.bf16.mxu0 %v1494
  %2051 = vmatpush1.bf16.msra.mxu0 %v1493
  %2052 = vmatprep.subr.bf16.mxu0 %v1496
  %2053 = vmatpush1.bf16.msra.mxu0 %v1495
  %2054 = vmatprep.subr.bf16.mxu0 %v1498
  %2055 = vmatpush1.bf16.msra.mxu0 %v1497
  %2056 = vmatprep.subr.bf16.mxu0 %v1500
  %2057 = vmatpush1.bf16.msra.mxu0 %v1499
  %2058 = vmatprep.subr.bf16.mxu0 %v1502
  %2059 = vmatpush1.bf16.msra.mxu0 %v1501
  %2060 = vmatprep.subr.bf16.mxu0 %v1504
  %2061 = vmatpush1.bf16.msra.mxu0 %v1503
  %2062 = vmatprep.subr.bf16.mxu0 %v1506
  %2063 = vmatpush1.bf16.msra.mxu0 %v1505
  %2064 = vmatprep.subr.bf16.mxu0 %v1508
  %2065 = vmatpush1.bf16.msra.mxu0 %v1507
  %2066 = vmatprep.subr.bf16.mxu0 %v1510
  %2067 = vmatpush1.bf16.msra.mxu0 %v1509
  %2068 = vmatprep.subr.bf16.mxu0 %v1512
  %2069 = vmatpush1.bf16.msra.mxu0 %v1511
  %2070 = vmatprep.subr.bf16.mxu0 %v1514
  %2071 = vmatpush1.bf16.msra.mxu0 %v1513
  %2072 = vmatprep.mubr.bf16.mxu0 %v294
  %2073 = vmatmul.mubr.bf16.gmra.mrb[0].mxu0 %v293
  %v2074 = vpop.f32.mrb[0].mxu0
  %v2075 = vadd.f32 %v2034, %v2074
  %v2076 = vpop.f32.mrb[0].mxu0
  %v2077 = vadd.f32 %v2036, %v2076
  %v2078 = vpop.f32.mrb[0].mxu0
  %v2079 = vpop.f32.mrb[0].mxu0
  %2080 = vdwg.mxu0
  %2081 = vmatprep.subr.bf16.mxu0 %v1516
  %2082 = vmatpush1.bf16.msra.mxu0 %v1515
  %2083 = vmatprep.subr.bf16.mxu0 %v1518
  %2084 = vmatpush1.bf16.msra.mxu0 %v1517
  %2085 = vmatprep.subr.bf16.mxu0 %v1520
  %2086 = vmatpush1.bf16.msra.mxu0 %v1519
  %2087 = vmatprep.subr.bf16.mxu0 %v1522
  %2088 = vmatpush1.bf16.msra.mxu0 %v1521
  %2089 = vmatprep.subr.bf16.mxu0 %v1524
  %2090 = vmatpush1.bf16.msra.mxu0 %v1523
  %2091 = vmatprep.subr.bf16.mxu0 %v1526
  %2092 = vmatpush1.bf16.msra.mxu0 %v1525
  %2093 = vmatprep.subr.bf16.mxu0 %v1528
  %2094 = vmatpush1.bf16.msra.mxu0 %v1527
  %2095 = vmatprep.subr.bf16.mxu0 %v1530
  %2096 = vmatpush1.bf16.msra.mxu0 %v1529
  %2097 = vmatprep.subr.bf16.mxu0 %v1532
  %2098 = vmatpush1.bf16.msra.mxu0 %v1531
  %2099 = vmatprep.subr.bf16.mxu0 %v1534
  %2100 = vmatpush1.bf16.msra.mxu0 %v1533
  %2101 = vmatprep.subr.bf16.mxu0 %v1536
  %2102 = vmatpush1.bf16.msra.mxu0 %v1535
  %2103 = vmatprep.subr.bf16.mxu0 %v1538
  %2104 = vmatpush1.bf16.msra.mxu0 %v1537
  %2105 = vmatprep.subr.bf16.mxu0 %v1540
  %2106 = vmatpush1.bf16.msra.mxu0 %v1539
  %2107 = vmatprep.subr.bf16.mxu0 %v1542
  %2108 = vmatpush1.bf16.msra.mxu0 %v1541
  %2109 = vmatprep.subr.bf16.mxu0 %v1544
  %2110 = vmatpush1.bf16.msra.mxu0 %v1543
  %2111 = vmatprep.subr.bf16.mxu0 %v1546
  %2112 = vmatpush1.bf16.msra.mxu0 %v1545
  %2113 = vmatprep.mubr.bf16.mxu0 %v296
  %2114 = vmatmul.mubr.bf16.gmra.mrb[0].mxu0 %v295
  %v2115 = vpop.f32.mrb[0].mxu0
  %v2116 = vadd.f32 %v2075, %v2115
  %v2117 = vpop.f32.mrb[0].mxu0
  %v2118 = vadd.f32 %v2077, %v2117
  %v2119 = vpop.f32.mrb[0].mxu0
  %v2120 = vpop.f32.mrb[0].mxu0
  %2121 = vdwg.mxu0
  %2122 = vmatprep.subr.bf16.mxu0 %v1548
  %2123 = vmatpush1.bf16.msra.mxu0 %v1547
  %2124 = vmatprep.subr.bf16.mxu0 %v1550
  %2125 = vmatpush1.bf16.msra.mxu0 %v1549
  %2126 = vmatprep.subr.bf16.mxu0 %v1552
  %2127 = vmatpush1.bf16.msra.mxu0 %v1551
  %2128 = vmatprep.subr.bf16.mxu0 %v1554
  %2129 = vmatpush1.bf16.msra.mxu0 %v1553
  %2130 = vmatprep.subr.bf16.mxu0 %v1556
  %2131 = vmatpush1.bf16.msra.mxu0 %v1555
  %2132 = vmatprep.subr.bf16.mxu0 %v1558
  %2133 = vmatpush1.bf16.msra.mxu0 %v1557
  %2134 = vmatprep.subr.bf16.mxu0 %v1560
  %2135 = vmatpush1.bf16.msra.mxu0 %v1559
  %2136 = vmatprep.subr.bf16.mxu0 %v1562
  %2137 = vmatpush1.bf16.msra.mxu0 %v1561
  %2138 = vmatprep.subr.bf16.mxu0 %v1564
  %2139 = vmatpush1.bf16.msra.mxu0 %v1563
  %2140 = vmatprep.subr.bf16.mxu0 %v1566
  %2141 = vmatpush1.bf16.msra.mxu0 %v1565
  %2142 = vmatprep.subr.bf16.mxu0 %v1568
  %2143 = vmatpush1.bf16.msra.mxu0 %v1567
  %2144 = vmatprep.subr.bf16.mxu0 %v1570
  %2145 = vmatpush1.bf16.msra.mxu0 %v1569
  %2146 = vmatprep.subr.bf16.mxu0 %v1572
  %2147 = vmatpush1.bf16.msra.mxu0 %v1571
  %2148 = vmatprep.subr.bf16.mxu0 %v1574
  %2149 = vmatpush1.bf16.msra.mxu0 %v1573
  %2150 = vmatprep.subr.bf16.mxu0 %v1576
  %2151 = vmatpush1.bf16.msra.mxu0 %v1575
  %2152 = vmatprep.subr.bf16.mxu0 %v1578
  %2153 = vmatpush1.bf16.msra.mxu0 %v1577
  %2154 = vmatprep.mubr.bf16.mxu0 %v298
  %2155 = vmatmul.mubr.bf16.gmra.mrb[0].mxu0 %v297
  %v2156 = vpop.f32.mrb[0].mxu0
  %v2157 = vadd.f32 %v2116, %v2156
  %v2158 = vpop.f32.mrb[0].mxu0
  %v2159 = vadd.f32 %v2118, %v2158
  %v2160 = vpop.f32.mrb[0].mxu0
  %v2161 = vpop.f32.mrb[0].mxu0
  %2162 = vdwg.mxu0
  %v2163 = vadd.f32 %v265, %v2157
  %v2164 = vadd.f32 %v266, %v2159
  %2165 = vst [vmem:[%s4] sm:$0xff] %v2163
  %2166 = vst [vmem:[%s4 + $0x8] sm:$0xff] %v2164
  // Predicated region
  $region22: #{image_cap_forward.1} parent=0 // pred_check
    %p2167 = pneg %p18
  $region23: #{image_cap_forward.1} parent=0 // pred_check_branch
    %2169 = sbr.rel (%p2167) target = $region25
  $region24: #{image_cap_forward.1} parent=0 // pred_region
    %v2170 = vld [vmem:[%s4] sm:$0xff]
    %v2171 = vld [vmem:[%s4 + $0x8] sm:$0xff]
    %v2172 = vld [vmem:[%s3] sm:$0x3]
    %v2174 = vlaneseq
    %v2175 = vshrl.u32 %v2174, 7
    %v2176 = vsub.s32 0, %v2175
    %v2177 = vrot.slane %v2172, %v2176
    %v2178 = vlaneseq
    %v2179 = vshrl.u32 %v2178, 7
    %v2180 = vsub.s32 1, %v2179
    %v2181 = vrot.slane %v2172, %v2180
    %v2184 = vadd.f32 %v2170, %v2177
    %v2185 = vadd.f32 %v2171, %v2181
    %2186 = vst [vmem:[%s4] sm:$0xff] %v2184
    %2187 = vst [vmem:[%s4 + $0x8] sm:$0xff] %v2185
  $region25: #{image_cap_forward.1} parent=0 // pred_fallthru
    _
  // Predicated region
  $region26: #{image_cap_forward.1} parent=0 // pred_check
    _
  $region27: #{image_cap_forward.1} parent=0 // pred_check_branch
    %2189 = sbr.rel (0) target = $region29
  $region28: #{image_cap_forward.1} parent=0 // pred_region
    _
  $region29: #{image_cap_forward.1} parent=0 // pred_fallthru
    _
  // Predicated region
  $region30: #{image_cap_forward.1} parent=0 // pred_check
    _
  $region31: #{image_cap_forward.1} parent=0 // pred_check_branch
    %2191 = sbr.rel (0) target = $region33
  $region32: #{image_cap_forward.1} parent=0 // pred_region
    _
  $region33: #{image_cap_forward.1} parent=0 // pred_fallthru
    _

</llo_original>
